<compile_context>
chip_gen: v7x
topology: tpu7x:2x2x1
jax: 0.10.0
libtpu: 0.0.40
codegen_flags: <defaults>
</compile_context>

<pallas_src>
import functools

import jax
import jax.numpy as jnp
from jax.experimental import pallas as pl
from jax.experimental.pallas import tpu as pltpu

_BN_EPS = 1e-5
_TM = 512  # rows per M-tile (multiple of 256 -> full MXU passes on v5e/v6e/v7x)


def _round_up(x, m):
    return ((x + m - 1) // m) * m


# -----------------------------------------------------------------------------
# Pass 1: conv as one big-K matmul per M-tile + bias + per-tile BN partial stats
# -----------------------------------------------------------------------------
def _conv_stats_kernel(x_ref, w_ref, b_ref, o_ref, sum_ref, sq_ref, *, tm, m_valid):
    """x_ref: (TM, Kp) bf16;  w_ref: (Kp, Cp) bf16;  b_ref: (1, Cp) f32.
    o_ref:   (TM, Cp) f32  conv + bias output tile.
    sum_ref, sq_ref: (1, 1, Cp) f32 per-tile partial sum / sum of squares
    (rows that are only M-padding are masked out of the statistics)."""
    acc = jnp.dot(x_ref[...], w_ref[...], preferred_element_type=jnp.float32)
    acc = acc + b_ref[...]

    row = (jax.lax.broadcasted_iota(jnp.int32, (tm, 1), 0)
           + pl.program_id(0) * tm)
    valid = (row < m_valid).astype(jnp.float32)            # (TM, 1)
    masked = acc * valid

    sum_ref[...] = jnp.sum(masked, axis=0, keepdims=True)[None]
    sq_ref[...] = jnp.sum(masked * acc, axis=0, keepdims=True)[None]
    o_ref[...] = acc


# -----------------------------------------------------------------------------
# Pass 2: folded BN affine (per-channel scale/shift) + ReLU, streamed over tiles
# -----------------------------------------------------------------------------
def _bn_relu_kernel(y_ref, scale_ref, shift_ref, o_ref):
    o_ref[...] = jnp.maximum(y_ref[...] * scale_ref[...] + shift_ref[...], 0.0)


def conv3d_bn_relu_pallas(x_ndhwc, w_dhwio, bias, gamma, beta, *, tm=_TM):
    """One Conv3d(k=3,p=1,s=1) + BatchNorm3d(batch stats) + ReLU block.

    x_ndhwc: (N, D, H, W, Cin); w_dhwio: (3, 3, 3, Cin, Cout)."""
    N, D, H, W, Cin = x_ndhwc.shape
    Cout = w_dhwio.shape[-1]
    M = N * D * H * W
    K = 27 * Cin
    Kp = _round_up(K, 128)
    Cp = _round_up(Cout, 128)
    Mp = _round_up(M, tm)
    n_tiles = Mp // tm

    # --- glue (plain JAX): pad + im2col, lane/row padding, bf16 cast ------------
    xp = jnp.pad(x_ndhwc, ((0, 0), (1, 1), (1, 1), (1, 1), (0, 0)))
    cols = []
    for kd in range(3):
        for kh in range(3):
            for kw in range(3):
                cols.append(
                    xp[:, kd:kd + D, kh:kh + H, kw:kw + W, :].reshape(M, Cin))
    x_col = jnp.concatenate(cols, axis=1)                       # (M, 27*Cin)
    x_col = jnp.pad(x_col, ((0, Mp - M), (0, Kp - K))).astype(jnp.bfloat16)

    w_col = w_dhwio.reshape(K, Cout)                            # (27*Cin, Cout)
    w_col = jnp.pad(w_col, ((0, Kp - K), (0, Cp - Cout))).astype(jnp.bfloat16)

    b_p = jnp.pad(bias.astype(jnp.float32), (0, Cp - Cout)).reshape(1, Cp)
    g_p = jnp.pad(gamma.astype(jnp.float32), (0, Cp - Cout))
    bt_p = jnp.pad(beta.astype(jnp.float32), (0, Cp - Cout))

    # --- pass 1: conv matmul + bias + per-tile BN partial stats -----------------
    conv_out, psum, psq = pl.pallas_call(
        functools.partial(_conv_stats_kernel, tm=tm, m_valid=M),
        out_shape=(
            jax.ShapeDtypeStruct((Mp, Cp), jnp.float32),
            jax.ShapeDtypeStruct((n_tiles, 1, Cp), jnp.float32),
            jax.ShapeDtypeStruct((n_tiles, 1, Cp), jnp.float32),
        ),
        grid_spec=pltpu.PrefetchScalarGridSpec(
            num_scalar_prefetch=0,
            grid=(n_tiles,),
            in_specs=[
                pl.BlockSpec((tm, Kp), lambda i: (i, 0)),
                pl.BlockSpec((Kp, Cp), lambda i: (0, 0)),
                pl.BlockSpec((1, Cp), lambda i: (0, 0)),
            ],
            out_specs=[
                pl.BlockSpec((tm, Cp), lambda i: (i, 0)),
                pl.BlockSpec((1, 1, Cp), lambda i: (i, 0, 0)),
                pl.BlockSpec((1, 1, Cp), lambda i: (i, 0, 0)),
            ],
        ),
        compiler_params=pltpu.CompilerParams(
            dimension_semantics=("parallel",)),
    )(x_col, w_col, b_p)

    # --- tiny per-channel epilogue (plain JAX): finish BN statistics ------------
    s = jnp.sum(psum[:, 0, :], axis=0)                    # (Cp,)
    ss = jnp.sum(psq[:, 0, :], axis=0)                    # (Cp,)
    mean = s / M
    var = jnp.maximum(ss / M - mean * mean, 0.0)          # biased variance (1/n)
    inv = jax.lax.rsqrt(var + _BN_EPS)
    scale = (g_p * inv).reshape(1, Cp)
    shift = (bt_p - mean * g_p * inv).reshape(1, Cp)

    # --- pass 2: normalize + ReLU, streamed over M tiles -------------------------
    out = pl.pallas_call(
        _bn_relu_kernel,
        out_shape=jax.ShapeDtypeStruct((Mp, Cp), jnp.float32),
        grid_spec=pltpu.PrefetchScalarGridSpec(
            num_scalar_prefetch=0,
            grid=(n_tiles,),
            in_specs=[
                pl.BlockSpec((tm, Cp), lambda i: (i, 0)),
                pl.BlockSpec((1, Cp), lambda i: (0, 0)),
                pl.BlockSpec((1, Cp), lambda i: (0, 0)),
            ],
            out_specs=pl.BlockSpec((tm, Cp), lambda i: (i, 0)),
        ),
        compiler_params=pltpu.CompilerParams(
            dimension_semantics=("parallel",)),
    )(conv_out, scale, shift)

    return out[:M, :Cout].reshape(N, D, H, W, Cout)


class MultiConv3dPallas:
    """Pallas equivalent of MultiConv3d(channels, normalization=BATCH_NORM)."""

    def __init__(self, channels, key):
        self.params = []
        for cin, cout in zip(channels[:-1], channels[1:]):
            key, kw_, kb_ = jax.random.split(key, 3)
            fan_in = cin * 27
            bound = 1.0 / (fan_in ** 0.5)
            w = jax.random.uniform(kw_, (3, 3, 3, cin, cout), jnp.float32,
                                   -bound, bound)
            b = jax.random.uniform(kb_, (cout,), jnp.float32, -bound, bound)
            gamma = jnp.ones((cout,), jnp.float32)   # BatchNorm3d default weight
            beta = jnp.zeros((cout,), jnp.float32)   # BatchNorm3d default bias
            self.params.append((w, b, gamma, beta))

    def __call__(self, x_ncdhw):
        x = jnp.transpose(x_ncdhw, (0, 2, 3, 4, 1))   # NCDHW -> NDHWC
        for (w, b, g, bt) in self.params:
            x = conv3d_bn_relu_pallas(x, w, b, g, bt)
        return jnp.transpose(x, (0, 4, 1, 2, 3))      # NDHWC -> NCDHW


# --- pure-JAX reference (mirrors the kernel's bf16-matmul / f32-accum precision) --
def _ref_layer(x_ndhwc, w_dhwio, bias, gamma, beta):
    y = jax.lax.conv_general_dilated(
        x_ndhwc.astype(jnp.bfloat16), w_dhwio.astype(jnp.bfloat16),
        window_strides=(1, 1, 1), padding="SAME",
        dimension_numbers=("NDHWC", "DHWIO", "NDHWC"),
        preferred_element_type=jnp.float32)
    y = y + bias
    mean = jnp.mean(y, axis=(0, 1, 2, 3), keepdims=True)
    var = jnp.mean((y - mean) ** 2, axis=(0, 1, 2, 3), keepdims=True)
    y = (y - mean) * jax.lax.rsqrt(var + _BN_EPS) * gamma + beta
    return jnp.maximum(y, 0.0)


def _ref_forward(x_ncdhw, params):
    x = jnp.transpose(x_ncdhw, (0, 2, 3, 4, 1))
    for (w, b, g, bt) in params:
        x = _ref_layer(x, w, b, g, bt)
    return jnp.transpose(x, (0, 4, 1, 2, 3))


if __name__ == "__main__":
    key = jax.random.PRNGKey(0)
    kx, kp = jax.random.split(key)

    channels = [4, 8, 8]                       # two Conv3d+BN+ReLU blocks
    N, D, H, W = 2, 8, 8, 8
    x = jax.random.normal(kx, (N, channels[0], D, H, W), jnp.float32)  # NCDHW

    model = MultiConv3dPallas(channels, kp)

    out = jax.block_until_ready(model(x))
    assert out.shape == (N, channels[-1], D, H, W), out.shape

    ref = jax.block_until_ready(_ref_forward(x, model.params))
    assert jnp.allclose(out, ref, atol=5e-3, rtol=5e-3), \
        float(jnp.max(jnp.abs(out - ref)))

    print("KERNEL_OK")
</pallas_src>

<mosaic_0001>
module attributes {stable_mosaic.version = 11 : i64} {
  func.func @_conv_stats_kernel(%arg0: i32, %arg1: memref<512x128xbf16, #tpu.memory_space<vmem>>, %arg2: memref<128x128xbf16, #tpu.memory_space<vmem>>, %arg3: memref<1x128xf32, #tpu.memory_space<vmem>>, %arg4: memref<512x128xf32, #tpu.memory_space<vmem>>, %arg5: memref<1x1x128xf32, #tpu.memory_space<vmem>>, %arg6: memref<1x1x128xf32, #tpu.memory_space<vmem>>) attributes {dimension_semantics = [#tpu.dimension_semantics<parallel>], iteration_bounds = array<i64: 2>, scalar_prefetch = 0 : i64, scratch_operands = 0 : i64, tpu.core_type = #tpu.core_type<tc>, window_params = [{transform_indices = @transform_0, window_bounds = array<i64: 512, 128>}, {pipeline_mode = #tpu.pipeline_mode<synchronous>, transform_indices = @transform_1, window_bounds = array<i64: 128, 128>}, {pipeline_mode = #tpu.pipeline_mode<synchronous>, transform_indices = @transform_2, window_bounds = array<i64: 1, 128>}, {transform_indices = @transform_3, window_bounds = array<i64: 512, 128>}, {transform_indices = @transform_4, window_bounds = array<i64: 1, 1, 128>}, {transform_indices = @transform_5, window_bounds = array<i64: 1, 1, 128>}]} {
    %c0 = arith.constant 0 : index
    %c0_0 = arith.constant 0 : index
    %0 = vector.load %arg1[%c0, %c0_0] : memref<512x128xbf16, #tpu.memory_space<vmem>>, vector<512x128xbf16>
    %c0_1 = arith.constant 0 : index
    %c0_2 = arith.constant 0 : index
    %1 = vector.load %arg2[%c0_1, %c0_2] : memref<128x128xbf16, #tpu.memory_space<vmem>>, vector<128x128xbf16>
    %cst = arith.constant dense<0.000000e+00> : vector<512x128xf32>
    %2 = tpu.matmul %0, %1, %cst {dimension_numbers = #tpu.dot_dimension_numbers<[1], [0], [0], [1], [0, 0, 1, 1], [], []>} : vector<512x128xbf16>, vector<128x128xbf16>, vector<512x128xf32> -> vector<512x128xf32>
    %c0_3 = arith.constant 0 : index
    %c0_4 = arith.constant 0 : index
    %3 = vector.load %arg3[%c0_3, %c0_4] : memref<1x128xf32, #tpu.memory_space<vmem>>, vector<1x128xf32>
    %4 = vector.broadcast %3 : vector<1x128xf32> to vector<512x128xf32>
    %5 = arith.addf %2, %4 : vector<512x128xf32>
    %6 = tpu.iota {dimensions = array<i32: 0>} : vector<512x1xi32>
    %c512_i32 = arith.constant 512 : i32
    %7 = arith.muli %arg0, %c512_i32 : i32
    %8 = vector.broadcast %7 : i32 to vector<512x1xi32>
    %9 = arith.addi %6, %8 : vector<512x1xi32>
    %c1024_i32 = arith.constant 1024 : i32
    %10 = vector.broadcast %c1024_i32 : i32 to vector<512x1xi32>
    %11 = arith.cmpi slt, %9, %10 : vector<512x1xi32>
    %12 = arith.extui %11 : vector<512x1xi1> to vector<512x1xi32>
    %13 = arith.sitofp %12 : vector<512x1xi32> to vector<512x1xf32>
    %14 = vector.broadcast %13 : vector<512x1xf32> to vector<512x128xf32>
    %15 = arith.mulf %5, %14 : vector<512x128xf32>
    %cst_5 = arith.constant dense<0.000000e+00> : vector<128xf32>
    %16 = vector.multi_reduction <add>, %15, %cst_5 [0] : vector<512x128xf32> to vector<128xf32>
    %17 = vector.shape_cast %16 : vector<128xf32> to vector<1x128xf32>
    %18 = vector.shape_cast %17 : vector<1x128xf32> to vector<1x1x128xf32>
    %c0_6 = arith.constant 0 : index
    %c0_7 = arith.constant 0 : index
    %c0_8 = arith.constant 0 : index
    %19 = vector.load %arg5[%c0_6, %c0_7, %c0_8] : memref<1x1x128xf32, #tpu.memory_space<vmem>>, vector<1x1x128xf32>
    tpu.vector_store %arg5[%c0_6, %c0_7, %c0_8], %18 {strides = array<i32>} : memref<1x1x128xf32, #tpu.memory_space<vmem>>, vector<1x1x128xf32>,
    %20 = arith.mulf %15, %5 : vector<512x128xf32>
    %cst_9 = arith.constant dense<0.000000e+00> : vector<128xf32>
    %21 = vector.multi_reduction <add>, %20, %cst_9 [0] : vector<512x128xf32> to vector<128xf32>
    %22 = vector.shape_cast %21 : vector<128xf32> to vector<1x128xf32>
    %23 = vector.shape_cast %22 : vector<1x128xf32> to vector<1x1x128xf32>
    %c0_10 = arith.constant 0 : index
    %c0_11 = arith.constant 0 : index
    %c0_12 = arith.constant 0 : index
    %24 = vector.load %arg6[%c0_10, %c0_11, %c0_12] : memref<1x1x128xf32, #tpu.memory_space<vmem>>, vector<1x1x128xf32>
    tpu.vector_store %arg6[%c0_10, %c0_11, %c0_12], %23 {strides = array<i32>} : memref<1x1x128xf32, #tpu.memory_space<vmem>>, vector<1x1x128xf32>,
    %c0_13 = arith.constant 0 : index
    %c0_14 = arith.constant 0 : index
    %25 = vector.load %arg4[%c0_13, %c0_14] : memref<512x128xf32, #tpu.memory_space<vmem>>, vector<512x128xf32>
    tpu.vector_store %arg4[%c0_13, %c0_14], %5 {strides = array<i32>} : memref<512x128xf32, #tpu.memory_space<vmem>>, vector<512x128xf32>,
    return
  }
  func.func @transform_0(%arg0: i32) -> (i32, i32) {
    %c0_i32 = arith.constant 0 : i32
    %c0_i32_0 = arith.constant 0 : i32
    return %arg0, %c0_i32 : i32, i32
  }
  func.func @transform_1(%arg0: i32) -> (i32, i32) {
    %c0_i32 = arith.constant 0 : i32
    %c0_i32_0 = arith.constant 0 : i32
    %c0_i32_1 = arith.constant 0 : i32
    return %c0_i32, %c0_i32_0 : i32, i32
  }
  func.func @transform_2(%arg0: i32) -> (i32, i32) {
    %c0_i32 = arith.constant 0 : i32
    %c0_i32_0 = arith.constant 0 : i32
    %c0_i32_1 = arith.constant 0 : i32
    return %c0_i32, %c0_i32_0 : i32, i32
  }
  func.func @transform_3(%arg0: i32) -> (i32, i32) {
    %c0_i32 = arith.constant 0 : i32
    %c0_i32_0 = arith.constant 0 : i32
    return %arg0, %c0_i32 : i32, i32
  }
  func.func @transform_4(%arg0: i32) -> (i32, i32, i32) {
    %c0_i32 = arith.constant 0 : i32
    %c0_i32_0 = arith.constant 0 : i32
    %c0_i32_1 = arith.constant 0 : i32
    return %arg0, %c0_i32, %c0_i32_0 : i32, i32, i32
  }
  func.func @transform_5(%arg0: i32) -> (i32, i32, i32) {
    %c0_i32 = arith.constant 0 : i32
    %c0_i32_0 = arith.constant 0 : i32
    %c0_i32_1 = arith.constant 0 : i32
    return %arg0, %c0_i32, %c0_i32_0 : i32, i32, i32
  }
}

</mosaic_0001>

<llo_original>
// kernel: tpu_custom_call.1
$region0: #{tpu_custom_call.1}
  #allocation0 [shape = 'u32[]', space=smem, size = 0x4, offset = 0x4, fixed_abs, tag = 'smem constant byte address 0x4 - core index']
  #allocation1 [shape = 'u32[144,128]{1,0:T(1,128)}', space=vmem, size = 0x12000, scoped, tag = 'internal scratch']
  %s0 = inlined_call_operand.hbm [shape: bf16[1024,128], index: 0, kind: input, shape index: {}]
  %s1 = inlined_call_operand.hbm [shape: bf16[128,128], index: 1, kind: input, shape index: {}]
  %s2 = inlined_call_operand.vmem [shape: f32[1,128], index: 2, kind: input, shape index: {}]
  %s3 = inlined_call_operand.hbm [shape: f32[1024,128], index: 3, kind: output, shape index: {0}]
  %s4 = inlined_call_operand.hbm [shape: f32[2,1,128], index: 4, kind: output, shape index: {1}]
  %s5 = inlined_call_operand.hbm [shape: f32[2,1,128], index: 5, kind: output, shape index: {2}]
  %6 = xla_tuple %s3, %s4, %s5
  %s7 = sld [smem:[#allocation0]]
  $region69: #{tpu_custom_call.1} parent=0
    _
  %s9 = ssub.s32 1, %s7
  %s10 = scalar_select 0, %s9, %s7
  $region1: #{tpu_custom_call.1} parent=0
    #allocation2 [shape = 'u8[262144]{0}', space=vmem, size = 0x40000, scoped, tag = 'input window, operand 0']
    #allocation3 [shape = 's32[2]{0}', space=sflag, size = 0x8, scoped, tag = 'scoped memory for tpu_custom_call.1']
    #allocation4 [shape = 's32[2]{0}', space=sflag, size = 0x8, scoped, tag = 'scoped memory for tpu_custom_call.1']
    #allocation5 [shape = 'u8[32768]{0}', space=vmem, size = 0x8000, scoped, tag = 'input window, operand 1, single buffered']
    #allocation6 [shape = 's32[1]{0}', space=sflag, size = 0x4, scoped, tag = 'scoped memory for tpu_custom_call.1']
    #allocation7 [shape = 'u8[524288]{0}', space=vmem, size = 0x80000, scoped, tag = 'output window, operand 0']
    #allocation8 [shape = 'u8[1024]{0}', space=vmem, size = 0x400, scoped, tag = 'output window, operand 1']
    #allocation9 [shape = 's32[2]{0}', space=sflag, size = 0x8, scoped, tag = 'scoped memory for tpu_custom_call.1']
    #allocation10 [shape = 'u8[1024]{0}', space=vmem, size = 0x400, scoped, tag = 'output window, operand 2']
    %11 = vsyncpa [#allocation3], 0
    %s12 = scalar_lea.sflag [#allocation3], 1
    %13 = vsyncpa %s12, 0
    %14 = vsyncpa [#allocation6], 0
    %15 = vsyncpa [#allocation4], 0
    %s16 = scalar_lea.sflag [#allocation4], 1
    %17 = vsyncpa %s16, 0
    %18 = vsyncpa [#allocation9], 0
    %s19 = scalar_lea.sflag [#allocation9], 1
    %20 = vsyncpa %s19, 0
    loop: start=0, step=1, limit=4
    $region2: #{tpu_custom_call.1} parent=1 // loop_pre_header
      _
    $region3: #{tpu_custom_call.1} parent=1 // loop_header
      %s22 = sphi 0, %s26
      %p23 = scmp.ge.s32.totalorder %s22, 4
      %s32 = sphi 0, %s34
      %s35 = sphi 0, %s32
      %s36 = sphi 0, %s35
      %s52 = sphi 0, %s36
      %s56 = sphi 0, %s56
      %s58 = sphi 0, %s56
      %s59 = sphi 0, %s58
      %s73 = sphi 0, %s59
      %s77 = sphi 0, %s77
      %s79 = sphi 0, %s77
      %s80 = sphi 0, %s79
      %s94 = sphi 0, %s80
      %s100 = sphi 0, %s102
      %s103 = sphi 0, %s100
      %s104 = sphi 0, %s103
      %s120 = sphi 0, %s104
      %s126 = sphi 0, %s128
      %s129 = sphi 0, %s126
      %s130 = sphi 0, %s129
      %s146 = sphi 0, %s130
      %s152 = sphi 0, %s154
      %s155 = sphi 0, %s152
      %s156 = sphi 0, %s155
      %s172 = sphi 0, %s156
    $region4: #{tpu_custom_call.1} parent=1 // loop_header_branch
      %25 = sbr.rel (%p23) target = $region8
    $region5: #{tpu_custom_call.1} parent=1 // loop_body
      %s27 = ssub.s32 %s22, 1
      %s28 = ssub.s32 %s22, 2
      %s29 = sadd.s32 %s22, 1
      %s30 = ssub.s32 %s22, %s29
      %p31 = scmp.eq.s32.totalorder %s30, 0
      %s33 = sadd.s32 %s32, 1
      %s34 = scalar_select %p31, %s32, %s33
      %p37 = pneg %p31
      %p38 = scmp.eq.s32.totalorder %s22, 1
      %p39 = por %p37, %p38
      %p40 = scmp.ne.s32.totalorder %s32, %s35
      %p41 = scmp.eq.s32.totalorder %s22, 0
      %p42 = por %p40, %p41
      %p43 = scmp.ne.s32.totalorder %s32, %s35
      %p44 = scmp.eq.s32.totalorder %s27, 1
      %p45 = por %p43, %p44
      %p46 = scmp.ne.s32.totalorder %s35, %s36
      %p47 = scmp.eq.s32.totalorder %s27, 0
      %p48 = por %p46, %p47
      %p49 = scmp.ne.s32.totalorder %s35, %s36
      %p50 = scmp.eq.s32.totalorder %s28, 1
      %p51 = por %p49, %p50
      %p53 = scmp.ne.s32.totalorder %s36, %s52
      %p54 = scmp.eq.s32.totalorder %s28, 0
      %p55 = por %p53, %p54
      %s57 = sadd.s32 %s56, 1
      %p60 = scmp.eq.s32.totalorder %s22, 1
      %p61 = scmp.ne.s32.totalorder %s56, %s58
      %p62 = scmp.eq.s32.totalorder %s22, 0
      %p63 = por %p61, %p62
      %p64 = scmp.ne.s32.totalorder %s56, %s58
      %p65 = scmp.eq.s32.totalorder %s27, 1
      %p66 = por %p64, %p65
      %p67 = scmp.ne.s32.totalorder %s58, %s59
      %p68 = scmp.eq.s32.totalorder %s27, 0
      %p69 = por %p67, %p68
      %p70 = scmp.ne.s32.totalorder %s58, %s59
      %p71 = scmp.eq.s32.totalorder %s28, 1
      %p72 = por %p70, %p71
      %p74 = scmp.ne.s32.totalorder %s59, %s73
      %p75 = scmp.eq.s32.totalorder %s28, 0
      %p76 = por %p74, %p75
      %s78 = sadd.s32 %s77, 1
      %p81 = scmp.eq.s32.totalorder %s22, 1
      %p82 = scmp.ne.s32.totalorder %s77, %s79
      %p83 = scmp.eq.s32.totalorder %s22, 0
      %p84 = por %p82, %p83
      %p85 = scmp.ne.s32.totalorder %s77, %s79
      %p86 = scmp.eq.s32.totalorder %s27, 1
      %p87 = por %p85, %p86
      %p88 = scmp.ne.s32.totalorder %s79, %s80
      %p89 = scmp.eq.s32.totalorder %s27, 0
      %p90 = por %p88, %p89
      %p91 = scmp.ne.s32.totalorder %s79, %s80
      %p92 = scmp.eq.s32.totalorder %s28, 1
      %p93 = por %p91, %p92
      %p95 = scmp.ne.s32.totalorder %s80, %s94
      %p96 = scmp.eq.s32.totalorder %s28, 0
      %p97 = por %p95, %p96
      %s98 = ssub.s32 %s22, %s29
      %p99 = scmp.eq.s32.totalorder %s98, 0
      %s101 = sadd.s32 %s100, 1
      %s102 = scalar_select %p99, %s100, %s101
      %p105 = pneg %p99
      %p106 = scmp.eq.s32.totalorder %s22, 1
      %p107 = por %p105, %p106
      %p108 = scmp.ne.s32.totalorder %s100, %s103
      %p109 = scmp.eq.s32.totalorder %s22, 0
      %p110 = por %p108, %p109
      %p111 = scmp.ne.s32.totalorder %s100, %s103
      %p112 = scmp.eq.s32.totalorder %s27, 1
      %p113 = por %p111, %p112
      %p114 = scmp.ne.s32.totalorder %s103, %s104
      %p115 = scmp.eq.s32.totalorder %s27, 0
      %p116 = por %p114, %p115
      %p117 = scmp.ne.s32.totalorder %s103, %s104
      %p118 = scmp.eq.s32.totalorder %s28, 1
      %p119 = por %p117, %p118
      %p121 = scmp.ne.s32.totalorder %s104, %s120
      %p122 = scmp.eq.s32.totalorder %s28, 0
      %p123 = por %p121, %p122
      %s124 = ssub.s32 %s22, %s29
      %p125 = scmp.eq.s32.totalorder %s124, 0
      %s127 = sadd.s32 %s126, 1
      %s128 = scalar_select %p125, %s126, %s127
      %p131 = pneg %p125
      %p132 = scmp.eq.s32.totalorder %s22, 1
      %p133 = por %p131, %p132
      %p134 = scmp.ne.s32.totalorder %s126, %s129
      %p135 = scmp.eq.s32.totalorder %s22, 0
      %p136 = por %p134, %p135
      %p137 = scmp.ne.s32.totalorder %s126, %s129
      %p138 = scmp.eq.s32.totalorder %s27, 1
      %p139 = por %p137, %p138
      %p140 = scmp.ne.s32.totalorder %s129, %s130
      %p141 = scmp.eq.s32.totalorder %s27, 0
      %p142 = por %p140, %p141
      %p143 = scmp.ne.s32.totalorder %s129, %s130
      %p144 = scmp.eq.s32.totalorder %s28, 1
      %p145 = por %p143, %p144
      %p147 = scmp.ne.s32.totalorder %s130, %s146
      %p148 = scmp.eq.s32.totalorder %s28, 0
      %p149 = por %p147, %p148
      %s150 = ssub.s32 %s22, %s29
      %p151 = scmp.eq.s32.totalorder %s150, 0
      %s153 = sadd.s32 %s152, 1
      %s154 = scalar_select %p151, %s152, %s153
      %p157 = pneg %p151
      %p158 = scmp.eq.s32.totalorder %s22, 1
      %p159 = por %p157, %p158
      %p160 = scmp.ne.s32.totalorder %s152, %s155
      %p161 = scmp.eq.s32.totalorder %s22, 0
      %p162 = por %p160, %p161
      %p163 = scmp.ne.s32.totalorder %s152, %s155
      %p164 = scmp.eq.s32.totalorder %s27, 1
      %p165 = por %p163, %p164
      %p166 = scmp.ne.s32.totalorder %s155, %s156
      %p167 = scmp.eq.s32.totalorder %s27, 0
      %p168 = por %p166, %p167
      %p169 = scmp.ne.s32.totalorder %s155, %s156
      %p170 = scmp.eq.s32.totalorder %s28, 1
      %p171 = por %p169, %p170
      %p173 = scmp.ne.s32.totalorder %s156, %s172
      %p174 = scmp.eq.s32.totalorder %s28, 0
      %p175 = por %p173, %p174
      %p176 = scmp.le.s32.totalorder 1, %s22
      %p177 = scmp.lt.s32.totalorder %s22, 3
      %p178 = pnand %p176, %p177
      %p179 = pneg %p178
      // Predicated region
      $region9: #{tpu_custom_call.1} parent=5 // pred_check
        _
      $region10: #{tpu_custom_call.1} parent=5 // pred_check_branch
        %181 = sbr.rel (%p178) target = $region12
      $region11: #{tpu_custom_call.1} parent=5 // pred_region
        %s182 = ssub.s32 %s22, 1
        // Predicated region
        $region13: #{tpu_custom_call.1} parent=11 // pred_check
          %p183 = pneg %p69
        $region14: #{tpu_custom_call.1} parent=11 // pred_check_branch
          %185 = sbr.rel (%p183) target = $region16
        $region15: #{tpu_custom_call.1} parent=11 // pred_region
          %s187 = ssub.s32 1024, 1024
          %188 = vsyncadd [#allocation6], %s187
          %s189 = sshll.u32 [#allocation5], 4
          %s190 = int_to_ptr.vmem [resolvable:$true] %s189
          %195 = dma.hbm_to_vmem [thread:$0]  %s1, 1024, %s190, [#allocation6], 64, 64, 4
        $region16: #{tpu_custom_call.1} parent=11 // pred_fallthru
          _
        // Predicated region
        $region17: #{tpu_custom_call.1} parent=11 // pred_check
          %p196 = pneg %p90
        $region18: #{tpu_custom_call.1} parent=11 // pred_check_branch
          %198 = sbr.rel (%p196) target = $region20
        $region19: #{tpu_custom_call.1} parent=11 // pred_region
          _
        $region20: #{tpu_custom_call.1} parent=11 // pred_fallthru
          _
      $region12: #{tpu_custom_call.1} parent=5 // pred_fallthru
        _
      %p199 = scmp.lt.s32.totalorder %s22, 2
      // Predicated region
      $region21: #{tpu_custom_call.1} parent=5 // pred_check
        %p200 = pneg %p199
      $region22: #{tpu_custom_call.1} parent=5 // pred_check_branch
        %202 = sbr.rel (%p200) target = $region24
      $region23: #{tpu_custom_call.1} parent=5 // pred_region
        // Predicated region
        $region25: #{tpu_custom_call.1} parent=23 // pred_check
          %p203 = pneg %p42
        $region26: #{tpu_custom_call.1} parent=23 // pred_check_branch
          %205 = sbr.rel (%p203) target = $region28
        $region27: #{tpu_custom_call.1} parent=23 // pred_region
          %s206 = sand.u32 %s32, 1
          %s207 = scalar_lea.sflag [#allocation3], %s206
          %s208 = sand.u32 %s32, 1
          %s209 = smul.addr %s208, 256
          %s210 = scalar_lea.vmem [#allocation2], %s209
          %s211 = smul.u32 64, %s22
          %s213 = ssub.s32 4096, 4096
          %214 = vsyncadd %s207, %s213
          %s215 = smul.addr %s211, 64
          %s216 = scalar_lea.hbm %s0, %s215
          %s217 = sshll.u32 %s210, 4
          %s218 = int_to_ptr.vmem [resolvable:$true] %s217
          %223 = dma.hbm_to_vmem [thread:$0]  %s216, 4096, %s218, %s207, 64, 64, 4
        $region28: #{tpu_custom_call.1} parent=23 // pred_fallthru
          _
      $region24: #{tpu_custom_call.1} parent=5 // pred_fallthru
        _
      %p224 = scmp.le.s32.totalorder 1, %s22
      %p225 = scmp.lt.s32.totalorder %s22, 3
      %p226 = pnand %p224, %p225
      %p227 = pneg %p226
      // Predicated region
      $region29: #{tpu_custom_call.1} parent=5 // pred_check
        _
      $region30: #{tpu_custom_call.1} parent=5 // pred_check_branch
        %229 = sbr.rel (%p226) target = $region32
      $region31: #{tpu_custom_call.1} parent=5 // pred_region
        %s230 = ssub.s32 %s22, 1
        %s231 = sand.u32 %s35, 1
        %s232 = scalar_lea.sflag [#allocation3], %s231
        %s233 = sand.u32 %s35, 1
        %s234 = smul.addr %s233, 256
        %s235 = scalar_lea.vmem [#allocation2], %s234
        // Predicated region
        $region33: #{tpu_custom_call.1} parent=31 // pred_check
          %p236 = pneg %p48
        $region34: #{tpu_custom_call.1} parent=31 // pred_check_branch
          %238 = sbr.rel (%p236) target = $region36
        $region35: #{tpu_custom_call.1} parent=31 // pred_region
          %239 = dma.done %s232, 4096
        $region36: #{tpu_custom_call.1} parent=31 // pred_fallthru
          _
        // Predicated region
        $region37: #{tpu_custom_call.1} parent=31 // pred_check
          %p240 = pneg %p69
        $region38: #{tpu_custom_call.1} parent=31 // pred_check_branch
          %242 = sbr.rel (%p240) target = $region40
        $region39: #{tpu_custom_call.1} parent=31 // pred_region
          %243 = dma.done [#allocation6], 1024
        $region40: #{tpu_custom_call.1} parent=31 // pred_fallthru
          _
        %s244 = sand.u32 %s35, 1
        %s245 = scalar_lea.sflag [#allocation3], %s244
        %s246 = sand.u32 %s35, 1
        %s247 = smul.addr %s246, 256
        %s248 = scalar_lea.vmem [#allocation2], %s247
        %p249 = pneg %p48
        %p250 = pneg %p45
        %p251 = pneg %p69
        %p252 = pneg %p66
        %p253 = pneg %p90
        %p254 = pneg %p87
        %p255 = pneg %p116
        %p256 = pneg %p113
        %s257 = sand.u32 %s103, 1
        %s258 = scalar_lea.sflag [#allocation4], %s257
        %s259 = sand.u32 %s103, 1
        %s260 = smul.addr %s259, 512
        %s261 = scalar_lea.vmem [#allocation7], %s260
        %p262 = pneg %p142
        %p263 = pneg %p139
        %s264 = sand.u32 %s27, 1
        %s265 = scalar_lea.sflag [#allocation9], %s264
        %s266 = sand.u32 %s129, 1
        %s267 = scalar_lea.vmem [#allocation8], %s266
        %p268 = pneg %p168
        %p269 = pneg %p165
        %s270 = sand.u32 %s27, 1
        %s271 = scalar_lea.sflag [#allocation9], %s270
        %s272 = sand.u32 %s155, 1
        %s273 = scalar_lea.vmem [#allocation10], %s272
        %s274 = smul.u32 64, %s27
        %s275 = smul.u32 64, %s27
        %v277 = vld [vmem:[%s235] sm:$0xf]
        %v278 = vld [vmem:[%s235 + $0x4] sm:$0xf]
        %v279 = vld [vmem:[%s235 + $0x8] sm:$0xf]
        %v280 = vld [vmem:[%s235 + $0xc] sm:$0xf]
        %v281 = vld [vmem:[%s235 + $0x10] sm:$0xf]
        %v282 = vld [vmem:[%s235 + $0x14] sm:$0xf]
        %v283 = vld [vmem:[%s235 + $0x18] sm:$0xf]
        %v284 = vld [vmem:[%s235 + $0x1c] sm:$0xf]
        %v285 = vld [vmem:[%s235 + $0x20] sm:$0xf]
        %v286 = vld [vmem:[%s235 + $0x24] sm:$0xf]
        %v287 = vld [vmem:[%s235 + $0x28] sm:$0xf]
        %v288 = vld [vmem:[%s235 + $0x2c] sm:$0xf]
        %v289 = vld [vmem:[%s235 + $0x30] sm:$0xf]
        %v290 = vld [vmem:[%s235 + $0x34] sm:$0xf]
        %v291 = vld [vmem:[%s235 + $0x38] sm:$0xf]
        %v292 = vld [vmem:[%s235 + $0x3c] sm:$0xf]
        %v293 = vld [vmem:[%s235 + $0x40] sm:$0xf]
        %v294 = vld [vmem:[%s235 + $0x44] sm:$0xf]
        %v295 = vld [vmem:[%s235 + $0x48] sm:$0xf]
        %v296 = vld [vmem:[%s235 + $0x4c] sm:$0xf]
        %v297 = vld [vmem:[%s235 + $0x50] sm:$0xf]
        %v298 = vld [vmem:[%s235 + $0x54] sm:$0xf]
        %v299 = vld [vmem:[%s235 + $0x58] sm:$0xf]
        %v300 = vld [vmem:[%s235 + $0x5c] sm:$0xf]
        %v301 = vld [vmem:[%s235 + $0x60] sm:$0xf]
        %v302 = vld [vmem:[%s235 + $0x64] sm:$0xf]
        %v303 = vld [vmem:[%s235 + $0x68] sm:$0xf]
        %v304 = vld [vmem:[%s235 + $0x6c] sm:$0xf]
        %v305 = vld [vmem:[%s235 + $0x70] sm:$0xf]
        %v306 = vld [vmem:[%s235 + $0x74] sm:$0xf]
        %v307 = vld [vmem:[%s235 + $0x78] sm:$0xf]
        %v308 = vld [vmem:[%s235 + $0x7c] sm:$0xf]
        %v309 = vld [vmem:[%s235 + $0x80] sm:$0xf]
        %v310 = vld [vmem:[%s235 + $0x84] sm:$0xf]
        %v311 = vld [vmem:[%s235 + $0x88] sm:$0xf]
        %v312 = vld [vmem:[%s235 + $0x8c] sm:$0xf]
        %v313 = vld [vmem:[%s235 + $0x90] sm:$0xf]
        %v314 = vld [vmem:[%s235 + $0x94] sm:$0xf]
        %v315 = vld [vmem:[%s235 + $0x98] sm:$0xf]
        %v316 = vld [vmem:[%s235 + $0x9c] sm:$0xf]
        %v317 = vld [vmem:[%s235 + $0xa0] sm:$0xf]
        %v318 = vld [vmem:[%s235 + $0xa4] sm:$0xf]
        %v319 = vld [vmem:[%s235 + $0xa8] sm:$0xf]
        %v320 = vld [vmem:[%s235 + $0xac] sm:$0xf]
        %v321 = vld [vmem:[%s235 + $0xb0] sm:$0xf]
        %v322 = vld [vmem:[%s235 + $0xb4] sm:$0xf]
        %v323 = vld [vmem:[%s235 + $0xb8] sm:$0xf]
        %v324 = vld [vmem:[%s235 + $0xbc] sm:$0xf]
        %v325 = vld [vmem:[%s235 + $0xc0] sm:$0xf]
        %v326 = vld [vmem:[%s235 + $0xc4] sm:$0xf]
        %v327 = vld [vmem:[%s235 + $0xc8] sm:$0xf]
        %v328 = vld [vmem:[%s235 + $0xcc] sm:$0xf]
        %v329 = vld [vmem:[%s235 + $0xd0] sm:$0xf]
        %v330 = vld [vmem:[%s235 + $0xd4] sm:$0xf]
        %v331 = vld [vmem:[%s235 + $0xd8] sm:$0xf]
        %v332 = vld [vmem:[%s235 + $0xdc] sm:$0xf]
        %v333 = vld [vmem:[%s235 + $0xe0] sm:$0xf]
        %v334 = vld [vmem:[%s235 + $0xe4] sm:$0xf]
        %v335 = vld [vmem:[%s235 + $0xe8] sm:$0xf]
        %v336 = vld [vmem:[%s235 + $0xec] sm:$0xf]
        %v337 = vld [vmem:[%s235 + $0xf0] sm:$0xf]
        %v338 = vld [vmem:[%s235 + $0xf4] sm:$0xf]
        %v339 = vld [vmem:[%s235 + $0xf8] sm:$0xf]
        %v340 = vld [vmem:[%s235 + $0xfc] sm:$0xf]
        %v341 = vld [vmem:[#allocation5] sm:$0xf]
        %v342 = vld [vmem:[#allocation5 + $0x4] sm:$0xf]
        %v343 = vld [vmem:[#allocation5 + $0x8] sm:$0xf]
        %v344 = vld [vmem:[#allocation5 + $0xc] sm:$0xf]
        %v345 = vld [vmem:[#allocation5 + $0x10] sm:$0xf]
        %v346 = vld [vmem:[#allocation5 + $0x14] sm:$0xf]
        %v347 = vld [vmem:[#allocation5 + $0x18] sm:$0xf]
        %v348 = vld [vmem:[#allocation5 + $0x1c] sm:$0xf]
        %v349 = vld [vmem:[#allocation5 + $0x20] sm:$0xf]
        %v350 = vld [vmem:[#allocation5 + $0x24] sm:$0xf]
        %v351 = vld [vmem:[#allocation5 + $0x28] sm:$0xf]
        %v352 = vld [vmem:[#allocation5 + $0x2c] sm:$0xf]
        %v353 = vld [vmem:[#allocation5 + $0x30] sm:$0xf]
        %v354 = vld [vmem:[#allocation5 + $0x34] sm:$0xf]
        %v355 = vld [vmem:[#allocation5 + $0x38] sm:$0xf]
        %v356 = vld [vmem:[#allocation5 + $0x3c] sm:$0xf]
        %v357 = vld [vmem:[%s2] sm:$0x1]
        %v359 = vlaneseq
        %v360 = vshrl.u32 %v359, 7
        %v361 = vsub.s32 0, %v360
        %v362 = vrot.slane %v357, %v361
        %v428 = vunpack.c.l.b16 %v277
        %v429 = vunpack.c.l.b16 %v278
        %v430 = vunpack.c.l.b16 %v279
        %v431 = vunpack.c.l.b16 %v280
        %v432 = vunpack.c.l.b16 %v281
        %v433 = vunpack.c.l.b16 %v282
        %v434 = vunpack.c.l.b16 %v283
        %v435 = vunpack.c.l.b16 %v284
        %v436 = vunpack.c.l.b16 %v285
        %v437 = vunpack.c.l.b16 %v286
        %v438 = vunpack.c.l.b16 %v287
        %v439 = vunpack.c.l.b16 %v288
        %v440 = vunpack.c.l.b16 %v289
        %v441 = vunpack.c.l.b16 %v290
        %v442 = vunpack.c.l.b16 %v291
        %v443 = vunpack.c.l.b16 %v292
        %v444 = vunpack.c.l.b16 %v293
        %v445 = vunpack.c.l.b16 %v294
        %v446 = vunpack.c.l.b16 %v295
        %v447 = vunpack.c.l.b16 %v296
        %v448 = vunpack.c.l.b16 %v297
        %v449 = vunpack.c.l.b16 %v298
        %v450 = vunpack.c.l.b16 %v299
        %v451 = vunpack.c.l.b16 %v300
        %v452 = vunpack.c.l.b16 %v301
        %v453 = vunpack.c.l.b16 %v302
        %v454 = vunpack.c.l.b16 %v303
        %v455 = vunpack.c.l.b16 %v304
        %v456 = vunpack.c.l.b16 %v305
        %v457 = vunpack.c.l.b16 %v306
        %v458 = vunpack.c.l.b16 %v307
        %v459 = vunpack.c.l.b16 %v308
        %v460 = vunpack.c.l.b16 %v309
        %v461 = vunpack.c.l.b16 %v310
        %v462 = vunpack.c.l.b16 %v311
        %v463 = vunpack.c.l.b16 %v312
        %v464 = vunpack.c.l.b16 %v313
        %v465 = vunpack.c.l.b16 %v314
        %v466 = vunpack.c.l.b16 %v315
        %v467 = vunpack.c.l.b16 %v316
        %v468 = vunpack.c.l.b16 %v317
        %v469 = vunpack.c.l.b16 %v318
        %v470 = vunpack.c.l.b16 %v319
        %v471 = vunpack.c.l.b16 %v320
        %v472 = vunpack.c.l.b16 %v321
        %v473 = vunpack.c.l.b16 %v322
        %v474 = vunpack.c.l.b16 %v323
        %v475 = vunpack.c.l.b16 %v324
        %v476 = vunpack.c.l.b16 %v325
        %v477 = vunpack.c.l.b16 %v326
        %v478 = vunpack.c.l.b16 %v327
        %v479 = vunpack.c.l.b16 %v328
        %v480 = vunpack.c.l.b16 %v329
        %v481 = vunpack.c.l.b16 %v330
        %v482 = vunpack.c.l.b16 %v331
        %v483 = vunpack.c.l.b16 %v332
        %v484 = vunpack.c.l.b16 %v333
        %v485 = vunpack.c.l.b16 %v334
        %v486 = vunpack.c.l.b16 %v335
        %v487 = vunpack.c.l.b16 %v336
        %v488 = vunpack.c.l.b16 %v337
        %v489 = vunpack.c.l.b16 %v338
        %v490 = vunpack.c.l.b16 %v339
        %v491 = vunpack.c.l.b16 %v340
        %v492 = vpack.c.b16 %v429, %v428
        %v493 = vpack.c.b16 %v431, %v430
        %v494 = vpack.c.b16 %v433, %v432
        %v495 = vpack.c.b16 %v435, %v434
        %v496 = vpack.c.b16 %v437, %v436
        %v497 = vpack.c.b16 %v439, %v438
        %v498 = vpack.c.b16 %v441, %v440
        %v499 = vpack.c.b16 %v443, %v442
        %v500 = vpack.c.b16 %v445, %v444
        %v501 = vpack.c.b16 %v447, %v446
        %v502 = vpack.c.b16 %v449, %v448
        %v503 = vpack.c.b16 %v451, %v450
        %v504 = vpack.c.b16 %v453, %v452
        %v505 = vpack.c.b16 %v455, %v454
        %v506 = vpack.c.b16 %v457, %v456
        %v507 = vpack.c.b16 %v459, %v458
        %v508 = vpack.c.b16 %v461, %v460
        %v509 = vpack.c.b16 %v463, %v462
        %v510 = vpack.c.b16 %v465, %v464
        %v511 = vpack.c.b16 %v467, %v466
        %v512 = vpack.c.b16 %v469, %v468
        %v513 = vpack.c.b16 %v471, %v470
        %v514 = vpack.c.b16 %v473, %v472
        %v515 = vpack.c.b16 %v475, %v474
        %v516 = vpack.c.b16 %v477, %v476
        %v517 = vpack.c.b16 %v479, %v478
        %v518 = vpack.c.b16 %v481, %v480
        %v519 = vpack.c.b16 %v483, %v482
        %v520 = vpack.c.b16 %v485, %v484
        %v521 = vpack.c.b16 %v487, %v486
        %v522 = vpack.c.b16 %v489, %v488
        %v523 = vpack.c.b16 %v491, %v490
        %v572 = vunpack.c.l.b16 %v341
        %v573 = vunpack.c.l.b16 %v342
        %v574 = vunpack.c.l.b16 %v343
        %v575 = vunpack.c.l.b16 %v344
        %v576 = vunpack.c.l.b16 %v345
        %v577 = vunpack.c.l.b16 %v346
        %v578 = vunpack.c.l.b16 %v347
        %v579 = vunpack.c.l.b16 %v348
        %v580 = vunpack.c.l.b16 %v349
        %v581 = vunpack.c.l.b16 %v350
        %v582 = vunpack.c.l.b16 %v351
        %v583 = vunpack.c.l.b16 %v352
        %v584 = vunpack.c.l.b16 %v353
        %v585 = vunpack.c.l.b16 %v354
        %v586 = vunpack.c.l.b16 %v355
        %v587 = vunpack.c.l.b16 %v356
        %v588 = vpack.c.b16 %v573, %v572
        %v589 = vpack.c.b16 %v575, %v574
        %v590 = vpack.c.b16 %v577, %v576
        %v591 = vpack.c.b16 %v579, %v578
        %v592 = vpack.c.b16 %v581, %v580
        %v593 = vpack.c.b16 %v583, %v582
        %v594 = vpack.c.b16 %v585, %v584
        %v595 = vpack.c.b16 %v587, %v586
        %604 = vmatprep.subr.bf16.mxu0 0
        %605 = vmatpush1.bf16.msra.mxu0 %v588
        %606 = vmatprep.subr.bf16.mxu0 0
        %607 = vmatpush1.bf16.msra.mxu0 %v589
        %608 = vmatprep.subr.bf16.mxu0 0
        %609 = vmatpush1.bf16.msra.mxu0 %v590
        %610 = vmatprep.subr.bf16.mxu0 0
        %611 = vmatpush1.bf16.msra.mxu0 %v591
        %612 = vmatprep.subr.bf16.mxu0 0
        %613 = vmatpush1.bf16.msra.mxu0 %v592
        %614 = vmatprep.subr.bf16.mxu0 0
        %615 = vmatpush1.bf16.msra.mxu0 %v593
        %616 = vmatprep.subr.bf16.mxu0 0
        %617 = vmatpush1.bf16.msra.mxu0 %v594
        %618 = vmatprep.subr.bf16.mxu0 0
        %619 = vmatpush1.bf16.msra.mxu0 %v595
        %620 = vmatprep.subr.bf16.mxu0 0
        %621 = vmatpush1.bf16.msra.mxu0 0
        %622 = vmatprep.subr.bf16.mxu0 0
        %623 = vmatpush1.bf16.msra.mxu0 0
        %624 = vmatprep.subr.bf16.mxu0 0
        %625 = vmatpush1.bf16.msra.mxu0 0
        %626 = vmatprep.subr.bf16.mxu0 0
        %627 = vmatpush1.bf16.msra.mxu0 0
        %628 = vmatprep.subr.bf16.mxu0 0
        %629 = vmatpush1.bf16.msra.mxu0 0
        %630 = vmatprep.subr.bf16.mxu0 0
        %631 = vmatpush1.bf16.msra.mxu0 0
        %632 = vmatprep.subr.bf16.mxu0 0
        %633 = vmatpush1.bf16.msra.mxu0 0
        %634 = vmatprep.subr.bf16.mxu0 0
        %635 = vmatpush1.bf16.msra.mxu0 0
        %636 = vmatprep.mubr.bf16.mxu0 0
        %637 = vmatmul.mubr.bf16.gmra.mrb[0].mxu0 %v492
        %v638 = vpop.f32.mrb[0].mxu0
        %v639 = vadd.f32 %v362, %v638
        %v640 = vpop.f32.mrb[0].mxu0
        %v641 = vpop.f32.mrb[0].mxu0
        %v642 = vadd.f32 %v362, %v641
        %v643 = vpop.f32.mrb[0].mxu0
        %644 = vmatprep.mubr.bf16.mxu0 0
        %645 = vmatmul.mubr.bf16.gmra.mrb[0].mxu0 %v493
        %v646 = vpop.f32.mrb[0].mxu0
        %v647 = vadd.f32 %v362, %v646
        %v648 = vpop.f32.mrb[0].mxu0
        %v649 = vpop.f32.mrb[0].mxu0
        %v650 = vadd.f32 %v362, %v649
        %v651 = vpop.f32.mrb[0].mxu0
        %652 = vmatprep.mubr.bf16.mxu0 0
        %653 = vmatmul.mubr.bf16.gmra.mrb[0].mxu0 %v494
        %v654 = vpop.f32.mrb[0].mxu0
        %v655 = vadd.f32 %v362, %v654
        %v656 = vpop.f32.mrb[0].mxu0
        %v657 = vpop.f32.mrb[0].mxu0
        %v658 = vadd.f32 %v362, %v657
        %v659 = vpop.f32.mrb[0].mxu0
        %660 = vmatprep.mubr.bf16.mxu0 0
        %661 = vmatmul.mubr.bf16.gmra.mrb[0].mxu0 %v495
        %v662 = vpop.f32.mrb[0].mxu0
        %v663 = vadd.f32 %v362, %v662
        %v664 = vpop.f32.mrb[0].mxu0
        %v665 = vpop.f32.mrb[0].mxu0
        %v666 = vadd.f32 %v362, %v665
        %v667 = vpop.f32.mrb[0].mxu0
        %668 = vmatprep.mubr.bf16.mxu0 0
        %669 = vmatmul.mubr.bf16.gmra.mrb[0].mxu0 %v496
        %v670 = vpop.f32.mrb[0].mxu0
        %v671 = vadd.f32 %v362, %v670
        %v672 = vpop.f32.mrb[0].mxu0
        %v673 = vpop.f32.mrb[0].mxu0
        %v674 = vadd.f32 %v362, %v673
        %v675 = vpop.f32.mrb[0].mxu0
        %676 = vmatprep.mubr.bf16.mxu0 0
        %677 = vmatmul.mubr.bf16.gmra.mrb[0].mxu0 %v497
        %v678 = vpop.f32.mrb[0].mxu0
        %v679 = vadd.f32 %v362, %v678
        %v680 = vpop.f32.mrb[0].mxu0
        %v681 = vpop.f32.mrb[0].mxu0
        %v682 = vadd.f32 %v362, %v681
        %v683 = vpop.f32.mrb[0].mxu0
        %684 = vmatprep.mubr.bf16.mxu0 0
        %685 = vmatmul.mubr.bf16.gmra.mrb[0].mxu0 %v498
        %v686 = vpop.f32.mrb[0].mxu0
        %v687 = vadd.f32 %v362, %v686
        %v688 = vpop.f32.mrb[0].mxu0
        %v689 = vpop.f32.mrb[0].mxu0
        %v690 = vadd.f32 %v362, %v689
        %v691 = vpop.f32.mrb[0].mxu0
        %692 = vmatprep.mubr.bf16.mxu0 0
        %693 = vmatmul.mubr.bf16.gmra.mrb[0].mxu0 %v499
        %v694 = vpop.f32.mrb[0].mxu0
        %v695 = vadd.f32 %v362, %v694
        %v696 = vpop.f32.mrb[0].mxu0
        %v697 = vpop.f32.mrb[0].mxu0
        %v698 = vadd.f32 %v362, %v697
        %v699 = vpop.f32.mrb[0].mxu0
        %700 = vmatprep.mubr.bf16.mxu0 0
        %701 = vmatmul.mubr.bf16.gmra.mrb[0].mxu0 %v500
        %v702 = vpop.f32.mrb[0].mxu0
        %v703 = vadd.f32 %v362, %v702
        %v704 = vpop.f32.mrb[0].mxu0
        %v705 = vpop.f32.mrb[0].mxu0
        %v706 = vadd.f32 %v362, %v705
        %v707 = vpop.f32.mrb[0].mxu0
        %708 = vmatprep.mubr.bf16.mxu0 0
        %709 = vmatmul.mubr.bf16.gmra.mrb[0].mxu0 %v501
        %v710 = vpop.f32.mrb[0].mxu0
        %v711 = vadd.f32 %v362, %v710
        %v712 = vpop.f32.mrb[0].mxu0
        %v713 = vpop.f32.mrb[0].mxu0
        %v714 = vadd.f32 %v362, %v713
        %v715 = vpop.f32.mrb[0].mxu0
        %716 = vmatprep.mubr.bf16.mxu0 0
        %717 = vmatmul.mubr.bf16.gmra.mrb[0].mxu0 %v502
        %v718 = vpop.f32.mrb[0].mxu0
        %v719 = vadd.f32 %v362, %v718
        %v720 = vpop.f32.mrb[0].mxu0
        %v721 = vpop.f32.mrb[0].mxu0
        %v722 = vadd.f32 %v362, %v721
        %v723 = vpop.f32.mrb[0].mxu0
        %724 = vmatprep.mubr.bf16.mxu0 0
        %725 = vmatmul.mubr.bf16.gmra.mrb[0].mxu0 %v503
        %v726 = vpop.f32.mrb[0].mxu0
        %v727 = vadd.f32 %v362, %v726
        %v728 = vpop.f32.mrb[0].mxu0
        %v729 = vpop.f32.mrb[0].mxu0
        %v730 = vadd.f32 %v362, %v729
        %v731 = vpop.f32.mrb[0].mxu0
        %732 = vmatprep.mubr.bf16.mxu0 0
        %733 = vmatmul.mubr.bf16.gmra.mrb[0].mxu0 %v504
        %v734 = vpop.f32.mrb[0].mxu0
        %v735 = vadd.f32 %v362, %v734
        %v736 = vpop.f32.mrb[0].mxu0
        %v737 = vpop.f32.mrb[0].mxu0
        %v738 = vadd.f32 %v362, %v737
        %v739 = vpop.f32.mrb[0].mxu0
        %740 = vmatprep.mubr.bf16.mxu0 0
        %741 = vmatmul.mubr.bf16.gmra.mrb[0].mxu0 %v505
        %v742 = vpop.f32.mrb[0].mxu0
        %v743 = vadd.f32 %v362, %v742
        %v744 = vpop.f32.mrb[0].mxu0
        %v745 = vpop.f32.mrb[0].mxu0
        %v746 = vadd.f32 %v362, %v745
        %v747 = vpop.f32.mrb[0].mxu0
        %748 = vmatprep.mubr.bf16.mxu0 0
        %749 = vmatmul.mubr.bf16.gmra.mrb[0].mxu0 %v506
        %v750 = vpop.f32.mrb[0].mxu0
        %v751 = vadd.f32 %v362, %v750
        %v752 = vpop.f32.mrb[0].mxu0
        %v753 = vpop.f32.mrb[0].mxu0
        %v754 = vadd.f32 %v362, %v753
        %v755 = vpop.f32.mrb[0].mxu0
        %756 = vmatprep.mubr.bf16.mxu0 0
        %757 = vmatmul.mubr.bf16.gmra.mrb[0].mxu0 %v507
        %v758 = vpop.f32.mrb[0].mxu0
        %v759 = vadd.f32 %v362, %v758
        %v760 = vpop.f32.mrb[0].mxu0
        %v761 = vpop.f32.mrb[0].mxu0
        %v762 = vadd.f32 %v362, %v761
        %v763 = vpop.f32.mrb[0].mxu0
        %764 = vmatprep.mubr.bf16.mxu0 0
        %765 = vmatmul.mubr.bf16.gmra.mrb[0].mxu0 %v508
        %v766 = vpop.f32.mrb[0].mxu0
        %v767 = vadd.f32 %v362, %v766
        %v768 = vpop.f32.mrb[0].mxu0
        %v769 = vpop.f32.mrb[0].mxu0
        %v770 = vadd.f32 %v362, %v769
        %v771 = vpop.f32.mrb[0].mxu0
        %772 = vmatprep.mubr.bf16.mxu0 0
        %773 = vmatmul.mubr.bf16.gmra.mrb[0].mxu0 %v509
        %v774 = vpop.f32.mrb[0].mxu0
        %v775 = vadd.f32 %v362, %v774
        %v776 = vpop.f32.mrb[0].mxu0
        %v777 = vpop.f32.mrb[0].mxu0
        %v778 = vadd.f32 %v362, %v777
        %v779 = vpop.f32.mrb[0].mxu0
        %780 = vmatprep.mubr.bf16.mxu0 0
        %781 = vmatmul.mubr.bf16.gmra.mrb[0].mxu0 %v510
        %v782 = vpop.f32.mrb[0].mxu0
        %v783 = vadd.f32 %v362, %v782
        %v784 = vpop.f32.mrb[0].mxu0
        %v785 = vpop.f32.mrb[0].mxu0
        %v786 = vadd.f32 %v362, %v785
        %v787 = vpop.f32.mrb[0].mxu0
        %788 = vmatprep.mubr.bf16.mxu0 0
        %789 = vmatmul.mubr.bf16.gmra.mrb[0].mxu0 %v511
        %v790 = vpop.f32.mrb[0].mxu0
        %v791 = vadd.f32 %v362, %v790
        %v792 = vpop.f32.mrb[0].mxu0
        %v793 = vpop.f32.mrb[0].mxu0
        %v794 = vadd.f32 %v362, %v793
        %v795 = vpop.f32.mrb[0].mxu0
        %796 = vmatprep.mubr.bf16.mxu0 0
        %797 = vmatmul.mubr.bf16.gmra.mrb[0].mxu0 %v512
        %v798 = vpop.f32.mrb[0].mxu0
        %v799 = vadd.f32 %v362, %v798
        %v800 = vpop.f32.mrb[0].mxu0
        %v801 = vpop.f32.mrb[0].mxu0
        %v802 = vadd.f32 %v362, %v801
        %v803 = vpop.f32.mrb[0].mxu0
        %804 = vmatprep.mubr.bf16.mxu0 0
        %805 = vmatmul.mubr.bf16.gmra.mrb[0].mxu0 %v513
        %v806 = vpop.f32.mrb[0].mxu0
        %v807 = vadd.f32 %v362, %v806
        %v808 = vpop.f32.mrb[0].mxu0
        %v809 = vpop.f32.mrb[0].mxu0
        %v810 = vadd.f32 %v362, %v809
        %v811 = vpop.f32.mrb[0].mxu0
        %812 = vmatprep.mubr.bf16.mxu0 0
        %813 = vmatmul.mubr.bf16.gmra.mrb[0].mxu0 %v514
        %v814 = vpop.f32.mrb[0].mxu0
        %v815 = vadd.f32 %v362, %v814
        %v816 = vpop.f32.mrb[0].mxu0
        %v817 = vpop.f32.mrb[0].mxu0
        %v818 = vadd.f32 %v362, %v817
        %v819 = vpop.f32.mrb[0].mxu0
        %820 = vmatprep.mubr.bf16.mxu0 0
        %821 = vmatmul.mubr.bf16.gmra.mrb[0].mxu0 %v515
        %v822 = vpop.f32.mrb[0].mxu0
        %v823 = vadd.f32 %v362, %v822
        %v824 = vpop.f32.mrb[0].mxu0
        %v825 = vpop.f32.mrb[0].mxu0
        %v826 = vadd.f32 %v362, %v825
        %v827 = vpop.f32.mrb[0].mxu0
        %828 = vmatprep.mubr.bf16.mxu0 0
        %829 = vmatmul.mubr.bf16.gmra.mrb[0].mxu0 %v516
        %v830 = vpop.f32.mrb[0].mxu0
        %v831 = vadd.f32 %v362, %v830
        %v832 = vpop.f32.mrb[0].mxu0
        %v833 = vpop.f32.mrb[0].mxu0
        %v834 = vadd.f32 %v362, %v833
        %v835 = vpop.f32.mrb[0].mxu0
        %836 = vmatprep.mubr.bf16.mxu0 0
        %837 = vmatmul.mubr.bf16.gmra.mrb[0].mxu0 %v517
        %v838 = vpop.f32.mrb[0].mxu0
        %v839 = vadd.f32 %v362, %v838
        %v840 = vpop.f32.mrb[0].mxu0
        %v841 = vpop.f32.mrb[0].mxu0
        %v842 = vadd.f32 %v362, %v841
        %v843 = vpop.f32.mrb[0].mxu0
        %844 = vmatprep.mubr.bf16.mxu0 0
        %845 = vmatmul.mubr.bf16.gmra.mrb[0].mxu0 %v518
        %v846 = vpop.f32.mrb[0].mxu0
        %v847 = vadd.f32 %v362, %v846
        %v848 = vpop.f32.mrb[0].mxu0
        %v849 = vpop.f32.mrb[0].mxu0
        %v850 = vadd.f32 %v362, %v849
        %v851 = vpop.f32.mrb[0].mxu0
        %852 = vmatprep.mubr.bf16.mxu0 0
        %853 = vmatmul.mubr.bf16.gmra.mrb[0].mxu0 %v519
        %v854 = vpop.f32.mrb[0].mxu0
        %v855 = vadd.f32 %v362, %v854
        %v856 = vpop.f32.mrb[0].mxu0
        %v857 = vpop.f32.mrb[0].mxu0
        %v858 = vadd.f32 %v362, %v857
        %v859 = vpop.f32.mrb[0].mxu0
        %860 = vmatprep.mubr.bf16.mxu0 0
        %861 = vmatmul.mubr.bf16.gmra.mrb[0].mxu0 %v520
        %v862 = vpop.f32.mrb[0].mxu0
        %v863 = vadd.f32 %v362, %v862
        %v864 = vpop.f32.mrb[0].mxu0
        %v865 = vpop.f32.mrb[0].mxu0
        %v866 = vadd.f32 %v362, %v865
        %v867 = vpop.f32.mrb[0].mxu0
        %868 = vmatprep.mubr.bf16.mxu0 0
        %869 = vmatmul.mubr.bf16.gmra.mrb[0].mxu0 %v521
        %v870 = vpop.f32.mrb[0].mxu0
        %v871 = vadd.f32 %v362, %v870
        %v872 = vpop.f32.mrb[0].mxu0
        %v873 = vpop.f32.mrb[0].mxu0
        %v874 = vadd.f32 %v362, %v873
        %v875 = vpop.f32.mrb[0].mxu0
        %876 = vmatprep.mubr.bf16.mxu0 0
        %877 = vmatmul.mubr.bf16.gmra.mrb[0].mxu0 %v522
        %v878 = vpop.f32.mrb[0].mxu0
        %v879 = vadd.f32 %v362, %v878
        %v880 = vpop.f32.mrb[0].mxu0
        %v881 = vpop.f32.mrb[0].mxu0
        %v882 = vadd.f32 %v362, %v881
        %v883 = vpop.f32.mrb[0].mxu0
        %884 = vmatprep.mubr.bf16.mxu0 0
        %885 = vmatmul.mubr.bf16.gmra.mrb[0].mxu0 %v523
        %v886 = vpop.f32.mrb[0].mxu0
        %v887 = vadd.f32 %v362, %v886
        %v888 = vpop.f32.mrb[0].mxu0
        %v889 = vpop.f32.mrb[0].mxu0
        %v890 = vadd.f32 %v362, %v889
        %v891 = vpop.f32.mrb[0].mxu0
        %892 = vdwg.mxu0
        %v893 = vlaneseq
        %v894 = vshrl.u32 %v893, 7
        %v895 = vadd.s32 %v894, 8
        %v896 = vadd.s32 %v894, 16
        %v897 = vadd.s32 %v894, 24
        %v898 = vadd.s32 %v894, 32
        %v899 = vadd.s32 %v894, 40
        %v900 = vadd.s32 %v894, 48
        %v901 = vadd.s32 %v894, 56
        %v902 = vadd.s32 %v894, 64
        %v903 = vadd.s32 %v894, 72
        %v904 = vadd.s32 %v894, 80
        %v905 = vadd.s32 %v894, 88
        %v906 = vadd.s32 %v894, 96
        %v907 = vadd.s32 %v894, 104
        %v908 = vadd.s32 %v894, 112
        %v909 = vadd.s32 %v894, 120
        %v910 = vadd.s32 %v894, 128
        %v911 = vadd.s32 %v894, 136
        %v912 = vadd.s32 %v894, 144
        %v913 = vadd.s32 %v894, 152
        %v914 = vadd.s32 %v894, 160
        %v915 = vadd.s32 %v894, 168
        %v916 = vadd.s32 %v894, 176
        %v917 = vadd.s32 %v894, 184
        %v918 = vadd.s32 %v894, 192
        %v919 = vadd.s32 %v894, 200
        %v920 = vadd.s32 %v894, 208
        %v921 = vadd.s32 %v894, 216
        %v922 = vadd.s32 %v894, 224
        %v923 = vadd.s32 %v894, 232
        %v924 = vadd.s32 %v894, 240
        %v925 = vadd.s32 %v894, 248
        %v926 = vadd.s32 %v894, 256
        %v927 = vadd.s32 %v894, 264
        %v928 = vadd.s32 %v894, 272
        %v929 = vadd.s32 %v894, 280
        %v930 = vadd.s32 %v894, 288
        %v931 = vadd.s32 %v894, 296
        %v932 = vadd.s32 %v894, 304
        %v933 = vadd.s32 %v894, 312
        %v934 = vadd.s32 %v894, 320
        %v935 = vadd.s32 %v894, 328
        %v936 = vadd.s32 %v894, 336
        %v937 = vadd.s32 %v894, 344
        %v938 = vadd.s32 %v894, 352
        %v939 = vadd.s32 %v894, 360
        %v940 = vadd.s32 %v894, 368
        %v941 = vadd.s32 %v894, 376
        %v942 = vadd.s32 %v894, 384
        %v943 = vadd.s32 %v894, 392
        %v944 = vadd.s32 %v894, 400
        %v945 = vadd.s32 %v894, 408
        %v946 = vadd.s32 %v894, 416
        %v947 = vadd.s32 %v894, 424
        %v948 = vadd.s32 %v894, 432
        %v949 = vadd.s32 %v894, 440
        %v950 = vadd.s32 %v894, 448
        %v951 = vadd.s32 %v894, 456
        %v952 = vadd.s32 %v894, 464
        %v953 = vadd.s32 %v894, 472
        %v954 = vadd.s32 %v894, 480
        %v955 = vadd.s32 %v894, 488
        %v956 = vadd.s32 %v894, 496
        %v957 = vadd.s32 %v894, 504
        %s958 = smul.u32 %s27, 512
        %v959 = vstv %s958
        %v960 = vadd.s32 %v894, %v959
        %v961 = vadd.s32 %v895, %v959
        %v962 = vadd.s32 %v896, %v959
        %v963 = vadd.s32 %v897, %v959
        %v964 = vadd.s32 %v898, %v959
        %v965 = vadd.s32 %v899, %v959
        %v966 = vadd.s32 %v900, %v959
        %v967 = vadd.s32 %v901, %v959
        %v968 = vadd.s32 %v902, %v959
        %v969 = vadd.s32 %v903, %v959
        %v970 = vadd.s32 %v904, %v959
        %v971 = vadd.s32 %v905, %v959
        %v972 = vadd.s32 %v906, %v959
        %v973 = vadd.s32 %v907, %v959
        %v974 = vadd.s32 %v908, %v959
        %v975 = vadd.s32 %v909, %v959
        %v976 = vadd.s32 %v910, %v959
        %v977 = vadd.s32 %v911, %v959
        %v978 = vadd.s32 %v912, %v959
        %v979 = vadd.s32 %v913, %v959
        %v980 = vadd.s32 %v914, %v959
        %v981 = vadd.s32 %v915, %v959
        %v982 = vadd.s32 %v916, %v959
        %v983 = vadd.s32 %v917, %v959
        %v984 = vadd.s32 %v918, %v959
        %v985 = vadd.s32 %v919, %v959
        %v986 = vadd.s32 %v920, %v959
        %v987 = vadd.s32 %v921, %v959
        %v988 = vadd.s32 %v922, %v959
        %v989 = vadd.s32 %v923, %v959
        %v990 = vadd.s32 %v924, %v959
        %v991 = vadd.s32 %v925, %v959
        %v992 = vadd.s32 %v926, %v959
        %v993 = vadd.s32 %v927, %v959
        %v994 = vadd.s32 %v928, %v959
        %v995 = vadd.s32 %v929, %v959
        %v996 = vadd.s32 %v930, %v959
        %v997 = vadd.s32 %v931, %v959
        %v998 = vadd.s32 %v932, %v959
        %v999 = vadd.s32 %v933, %v959
        %v1000 = vadd.s32 %v934, %v959
        %v1001 = vadd.s32 %v935, %v959
        %v1002 = vadd.s32 %v936, %v959
        %v1003 = vadd.s32 %v937, %v959
        %v1004 = vadd.s32 %v938, %v959
        %v1005 = vadd.s32 %v939, %v959
        %v1006 = vadd.s32 %v940, %v959
        %v1007 = vadd.s32 %v941, %v959
        %v1008 = vadd.s32 %v942, %v959
        %v1009 = vadd.s32 %v943, %v959
        %v1010 = vadd.s32 %v944, %v959
        %v1011 = vadd.s32 %v945, %v959
        %v1012 = vadd.s32 %v946, %v959
        %v1013 = vadd.s32 %v947, %v959
        %v1014 = vadd.s32 %v948, %v959
        %v1015 = vadd.s32 %v949, %v959
        %v1016 = vadd.s32 %v950, %v959
        %v1017 = vadd.s32 %v951, %v959
        %v1018 = vadd.s32 %v952, %v959
        %v1019 = vadd.s32 %v953, %v959
        %v1020 = vadd.s32 %v954, %v959
        %v1021 = vadd.s32 %v955, %v959
        %v1022 = vadd.s32 %v956, %v959
        %v1023 = vadd.s32 %v957, %v959
        %vm1024 = vcmp.lt.s32.totalorder %v960, 1024
        %vm1025 = vcmp.lt.s32.totalorder %v961, 1024
        %vm1026 = vcmp.lt.s32.totalorder %v962, 1024
        %vm1027 = vcmp.lt.s32.totalorder %v963, 1024
        %vm1028 = vcmp.lt.s32.totalorder %v964, 1024
        %vm1029 = vcmp.lt.s32.totalorder %v965, 1024
        %vm1030 = vcmp.lt.s32.totalorder %v966, 1024
        %vm1031 = vcmp.lt.s32.totalorder %v967, 1024
        %vm1032 = vcmp.lt.s32.totalorder %v968, 1024
        %vm1033 = vcmp.lt.s32.totalorder %v969, 1024
        %vm1034 = vcmp.lt.s32.totalorder %v970, 1024
        %vm1035 = vcmp.lt.s32.totalorder %v971, 1024
        %vm1036 = vcmp.lt.s32.totalorder %v972, 1024
        %vm1037 = vcmp.lt.s32.totalorder %v973, 1024
        %vm1038 = vcmp.lt.s32.totalorder %v974, 1024
        %vm1039 = vcmp.lt.s32.totalorder %v975, 1024
        %vm1040 = vcmp.lt.s32.totalorder %v976, 1024
        %vm1041 = vcmp.lt.s32.totalorder %v977, 1024
        %vm1042 = vcmp.lt.s32.totalorder %v978, 1024
        %vm1043 = vcmp.lt.s32.totalorder %v979, 1024
        %vm1044 = vcmp.lt.s32.totalorder %v980, 1024
        %vm1045 = vcmp.lt.s32.totalorder %v981, 1024
        %vm1046 = vcmp.lt.s32.totalorder %v982, 1024
        %vm1047 = vcmp.lt.s32.totalorder %v983, 1024
        %vm1048 = vcmp.lt.s32.totalorder %v984, 1024
        %vm1049 = vcmp.lt.s32.totalorder %v985, 1024
        %vm1050 = vcmp.lt.s32.totalorder %v986, 1024
        %vm1051 = vcmp.lt.s32.totalorder %v987, 1024
        %vm1052 = vcmp.lt.s32.totalorder %v988, 1024
        %vm1053 = vcmp.lt.s32.totalorder %v989, 1024
        %vm1054 = vcmp.lt.s32.totalorder %v990, 1024
        %vm1055 = vcmp.lt.s32.totalorder %v991, 1024
        %vm1056 = vcmp.lt.s32.totalorder %v992, 1024
        %vm1057 = vcmp.lt.s32.totalorder %v993, 1024
        %vm1058 = vcmp.lt.s32.totalorder %v994, 1024
        %vm1059 = vcmp.lt.s32.totalorder %v995, 1024
        %vm1060 = vcmp.lt.s32.totalorder %v996, 1024
        %vm1061 = vcmp.lt.s32.totalorder %v997, 1024
        %vm1062 = vcmp.lt.s32.totalorder %v998, 1024
        %vm1063 = vcmp.lt.s32.totalorder %v999, 1024
        %vm1064 = vcmp.lt.s32.totalorder %v1000, 1024
        %vm1065 = vcmp.lt.s32.totalorder %v1001, 1024
        %vm1066 = vcmp.lt.s32.totalorder %v1002, 1024
        %vm1067 = vcmp.lt.s32.totalorder %v1003, 1024
        %vm1068 = vcmp.lt.s32.totalorder %v1004, 1024
        %vm1069 = vcmp.lt.s32.totalorder %v1005, 1024
        %vm1070 = vcmp.lt.s32.totalorder %v1006, 1024
        %vm1071 = vcmp.lt.s32.totalorder %v1007, 1024
        %vm1072 = vcmp.lt.s32.totalorder %v1008, 1024
        %vm1073 = vcmp.lt.s32.totalorder %v1009, 1024
        %vm1074 = vcmp.lt.s32.totalorder %v1010, 1024
        %vm1075 = vcmp.lt.s32.totalorder %v1011, 1024
        %vm1076 = vcmp.lt.s32.totalorder %v1012, 1024
        %vm1077 = vcmp.lt.s32.totalorder %v1013, 1024
        %vm1078 = vcmp.lt.s32.totalorder %v1014, 1024
        %vm1079 = vcmp.lt.s32.totalorder %v1015, 1024
        %vm1080 = vcmp.lt.s32.totalorder %v1016, 1024
        %vm1081 = vcmp.lt.s32.totalorder %v1017, 1024
        %vm1082 = vcmp.lt.s32.totalorder %v1018, 1024
        %vm1083 = vcmp.lt.s32.totalorder %v1019, 1024
        %vm1084 = vcmp.lt.s32.totalorder %v1020, 1024
        %vm1085 = vcmp.lt.s32.totalorder %v1021, 1024
        %vm1086 = vcmp.lt.s32.totalorder %v1022, 1024
        %vm1087 = vcmp.lt.s32.totalorder %v1023, 1024
        %v1088 = vsel %vm1024, 1, 0
        %v1089 = vsel %vm1025, 1, 0
        %v1090 = vsel %vm1026, 1, 0
        %v1091 = vsel %vm1027, 1, 0
        %v1092 = vsel %vm1028, 1, 0
        %v1093 = vsel %vm1029, 1, 0
        %v1094 = vsel %vm1030, 1, 0
        %v1095 = vsel %vm1031, 1, 0
        %v1096 = vsel %vm1032, 1, 0
        %v1097 = vsel %vm1033, 1, 0
        %v1098 = vsel %vm1034, 1, 0
        %v1099 = vsel %vm1035, 1, 0
        %v1100 = vsel %vm1036, 1, 0
        %v1101 = vsel %vm1037, 1, 0
        %v1102 = vsel %vm1038, 1, 0
        %v1103 = vsel %vm1039, 1, 0
        %v1104 = vsel %vm1040, 1, 0
        %v1105 = vsel %vm1041, 1, 0
        %v1106 = vsel %vm1042, 1, 0
        %v1107 = vsel %vm1043, 1, 0
        %v1108 = vsel %vm1044, 1, 0
        %v1109 = vsel %vm1045, 1, 0
        %v1110 = vsel %vm1046, 1, 0
        %v1111 = vsel %vm1047, 1, 0
        %v1112 = vsel %vm1048, 1, 0
        %v1113 = vsel %vm1049, 1, 0
        %v1114 = vsel %vm1050, 1, 0
        %v1115 = vsel %vm1051, 1, 0
        %v1116 = vsel %vm1052, 1, 0
        %v1117 = vsel %vm1053, 1, 0
        %v1118 = vsel %vm1054, 1, 0
        %v1119 = vsel %vm1055, 1, 0
        %v1120 = vsel %vm1056, 1, 0
        %v1121 = vsel %vm1057, 1, 0
        %v1122 = vsel %vm1058, 1, 0
        %v1123 = vsel %vm1059, 1, 0
        %v1124 = vsel %vm1060, 1, 0
        %v1125 = vsel %vm1061, 1, 0
        %v1126 = vsel %vm1062, 1, 0
        %v1127 = vsel %vm1063, 1, 0
        %v1128 = vsel %vm1064, 1, 0
        %v1129 = vsel %vm1065, 1, 0
        %v1130 = vsel %vm1066, 1, 0
        %v1131 = vsel %vm1067, 1, 0
        %v1132 = vsel %vm1068, 1, 0
        %v1133 = vsel %vm1069, 1, 0
        %v1134 = vsel %vm1070, 1, 0
        %v1135 = vsel %vm1071, 1, 0
        %v1136 = vsel %vm1072, 1, 0
        %v1137 = vsel %vm1073, 1, 0
        %v1138 = vsel %vm1074, 1, 0
        %v1139 = vsel %vm1075, 1, 0
        %v1140 = vsel %vm1076, 1, 0
        %v1141 = vsel %vm1077, 1, 0
        %v1142 = vsel %vm1078, 1, 0
        %v1143 = vsel %vm1079, 1, 0
        %v1144 = vsel %vm1080, 1, 0
        %v1145 = vsel %vm1081, 1, 0
        %v1146 = vsel %vm1082, 1, 0
        %v1147 = vsel %vm1083, 1, 0
        %v1148 = vsel %vm1084, 1, 0
        %v1149 = vsel %vm1085, 1, 0
        %v1150 = vsel %vm1086, 1, 0
        %v1151 = vsel %vm1087, 1, 0
        %v1152 = vcvt.s32.f32 %v1088
        %v1153 = vcvt.s32.f32 %v1089
        %v1154 = vcvt.s32.f32 %v1090
        %v1155 = vcvt.s32.f32 %v1091
        %v1156 = vcvt.s32.f32 %v1092
        %v1157 = vcvt.s32.f32 %v1093
        %v1158 = vcvt.s32.f32 %v1094
        %v1159 = vcvt.s32.f32 %v1095
        %v1160 = vcvt.s32.f32 %v1096
        %v1161 = vcvt.s32.f32 %v1097
        %v1162 = vcvt.s32.f32 %v1098
        %v1163 = vcvt.s32.f32 %v1099
        %v1164 = vcvt.s32.f32 %v1100
        %v1165 = vcvt.s32.f32 %v1101
        %v1166 = vcvt.s32.f32 %v1102
        %v1167 = vcvt.s32.f32 %v1103
        %v1168 = vcvt.s32.f32 %v1104
        %v1169 = vcvt.s32.f32 %v1105
        %v1170 = vcvt.s32.f32 %v1106
        %v1171 = vcvt.s32.f32 %v1107
        %v1172 = vcvt.s32.f32 %v1108
        %v1173 = vcvt.s32.f32 %v1109
        %v1174 = vcvt.s32.f32 %v1110
        %v1175 = vcvt.s32.f32 %v1111
        %v1176 = vcvt.s32.f32 %v1112
        %v1177 = vcvt.s32.f32 %v1113
        %v1178 = vcvt.s32.f32 %v1114
        %v1179 = vcvt.s32.f32 %v1115
        %v1180 = vcvt.s32.f32 %v1116
        %v1181 = vcvt.s32.f32 %v1117
        %v1182 = vcvt.s32.f32 %v1118
        %v1183 = vcvt.s32.f32 %v1119
        %v1184 = vcvt.s32.f32 %v1120
        %v1185 = vcvt.s32.f32 %v1121
        %v1186 = vcvt.s32.f32 %v1122
        %v1187 = vcvt.s32.f32 %v1123
        %v1188 = vcvt.s32.f32 %v1124
        %v1189 = vcvt.s32.f32 %v1125
        %v1190 = vcvt.s32.f32 %v1126
        %v1191 = vcvt.s32.f32 %v1127
        %v1192 = vcvt.s32.f32 %v1128
        %v1193 = vcvt.s32.f32 %v1129
        %v1194 = vcvt.s32.f32 %v1130
        %v1195 = vcvt.s32.f32 %v1131
        %v1196 = vcvt.s32.f32 %v1132
        %v1197 = vcvt.s32.f32 %v1133
        %v1198 = vcvt.s32.f32 %v1134
        %v1199 = vcvt.s32.f32 %v1135
        %v1200 = vcvt.s32.f32 %v1136
        %v1201 = vcvt.s32.f32 %v1137
        %v1202 = vcvt.s32.f32 %v1138
        %v1203 = vcvt.s32.f32 %v1139
        %v1204 = vcvt.s32.f32 %v1140
        %v1205 = vcvt.s32.f32 %v1141
        %v1206 = vcvt.s32.f32 %v1142
        %v1207 = vcvt.s32.f32 %v1143
        %v1208 = vcvt.s32.f32 %v1144
        %v1209 = vcvt.s32.f32 %v1145
        %v1210 = vcvt.s32.f32 %v1146
        %v1211 = vcvt.s32.f32 %v1147
        %v1212 = vcvt.s32.f32 %v1148
        %v1213 = vcvt.s32.f32 %v1149
        %v1214 = vcvt.s32.f32 %v1150
        %v1215 = vcvt.s32.f32 %v1151
        %v1216 = vmul.f32 %v639, %v1152
        %v1217 = vmul.f32 %v642, %v1153
        %v1218 = vmul.f32 %v647, %v1154
        %v1219 = vmul.f32 %v650, %v1155
        %v1220 = vmul.f32 %v655, %v1156
        %v1221 = vmul.f32 %v658, %v1157
        %v1222 = vmul.f32 %v663, %v1158
        %v1223 = vmul.f32 %v666, %v1159
        %v1224 = vmul.f32 %v671, %v1160
        %v1225 = vmul.f32 %v674, %v1161
        %v1226 = vmul.f32 %v679, %v1162
        %v1227 = vmul.f32 %v682, %v1163
        %v1228 = vmul.f32 %v687, %v1164
        %v1229 = vmul.f32 %v690, %v1165
        %v1230 = vmul.f32 %v695, %v1166
        %v1231 = vmul.f32 %v698, %v1167
        %v1232 = vmul.f32 %v703, %v1168
        %v1233 = vmul.f32 %v706, %v1169
        %v1234 = vmul.f32 %v711, %v1170
        %v1235 = vmul.f32 %v714, %v1171
        %v1236 = vmul.f32 %v719, %v1172
        %v1237 = vmul.f32 %v722, %v1173
        %v1238 = vmul.f32 %v727, %v1174
        %v1239 = vmul.f32 %v730, %v1175
        %v1240 = vmul.f32 %v735, %v1176
        %v1241 = vmul.f32 %v738, %v1177
        %v1242 = vmul.f32 %v743, %v1178
        %v1243 = vmul.f32 %v746, %v1179
        %v1244 = vmul.f32 %v751, %v1180
        %v1245 = vmul.f32 %v754, %v1181
        %v1246 = vmul.f32 %v759, %v1182
        %v1247 = vmul.f32 %v762, %v1183
        %v1248 = vmul.f32 %v767, %v1184
        %v1249 = vmul.f32 %v770, %v1185
        %v1250 = vmul.f32 %v775, %v1186
        %v1251 = vmul.f32 %v778, %v1187
        %v1252 = vmul.f32 %v783, %v1188
        %v1253 = vmul.f32 %v786, %v1189
        %v1254 = vmul.f32 %v791, %v1190
        %v1255 = vmul.f32 %v794, %v1191
        %v1256 = vmul.f32 %v799, %v1192
        %v1257 = vmul.f32 %v802, %v1193
        %v1258 = vmul.f32 %v807, %v1194
        %v1259 = vmul.f32 %v810, %v1195
        %v1260 = vmul.f32 %v815, %v1196
        %v1261 = vmul.f32 %v818, %v1197
        %v1262 = vmul.f32 %v823, %v1198
        %v1263 = vmul.f32 %v826, %v1199
        %v1264 = vmul.f32 %v831, %v1200
        %v1265 = vmul.f32 %v834, %v1201
        %v1266 = vmul.f32 %v839, %v1202
        %v1267 = vmul.f32 %v842, %v1203
        %v1268 = vmul.f32 %v847, %v1204
        %v1269 = vmul.f32 %v850, %v1205
        %v1270 = vmul.f32 %v855, %v1206
        %v1271 = vmul.f32 %v858, %v1207
        %v1272 = vmul.f32 %v863, %v1208
        %v1273 = vmul.f32 %v866, %v1209
        %v1274 = vmul.f32 %v871, %v1210
        %v1275 = vmul.f32 %v874, %v1211
        %v1276 = vmul.f32 %v879, %v1212
        %v1277 = vmul.f32 %v882, %v1213
        %v1278 = vmul.f32 %v887, %v1214
        %v1279 = vmul.f32 %v890, %v1215
        %v1280 = vadd.f32 %v1216, %v1217
        %v1281 = vadd.f32 %v1280, %v1218
        %v1282 = vadd.f32 %v1281, %v1219
        %v1283 = vadd.f32 %v1282, %v1220
        %v1284 = vadd.f32 %v1283, %v1221
        %v1285 = vadd.f32 %v1284, %v1222
        %v1286 = vadd.f32 %v1285, %v1223
        %v1287 = vadd.f32 %v1286, %v1224
        %v1288 = vadd.f32 %v1287, %v1225
        %v1289 = vadd.f32 %v1288, %v1226
        %v1290 = vadd.f32 %v1289, %v1227
        %v1291 = vadd.f32 %v1290, %v1228
        %v1292 = vadd.f32 %v1291, %v1229
        %v1293 = vadd.f32 %v1292, %v1230
        %v1294 = vadd.f32 %v1293, %v1231
        %v1295 = vadd.f32 %v1294, %v1232
        %v1296 = vadd.f32 %v1295, %v1233
        %v1297 = vadd.f32 %v1296, %v1234
        %v1298 = vadd.f32 %v1297, %v1235
        %v1299 = vadd.f32 %v1298, %v1236
        %v1300 = vadd.f32 %v1299, %v1237
        %v1301 = vadd.f32 %v1300, %v1238
        %v1302 = vadd.f32 %v1301, %v1239
        %v1303 = vadd.f32 %v1302, %v1240
        %v1304 = vadd.f32 %v1303, %v1241
        %v1305 = vadd.f32 %v1304, %v1242
        %v1306 = vadd.f32 %v1305, %v1243
        %v1307 = vadd.f32 %v1306, %v1244
        %v1308 = vadd.f32 %v1307, %v1245
        %v1309 = vadd.f32 %v1308, %v1246
        %v1310 = vadd.f32 %v1309, %v1247
        %v1311 = vadd.f32 %v1310, %v1248
        %v1312 = vadd.f32 %v1311, %v1249
        %v1313 = vadd.f32 %v1312, %v1250
        %v1314 = vadd.f32 %v1313, %v1251
        %v1315 = vadd.f32 %v1314, %v1252
        %v1316 = vadd.f32 %v1315, %v1253
        %v1317 = vadd.f32 %v1316, %v1254
        %v1318 = vadd.f32 %v1317, %v1255
        %v1319 = vadd.f32 %v1318, %v1256
        %v1320 = vadd.f32 %v1319, %v1257
        %v1321 = vadd.f32 %v1320, %v1258
        %v1322 = vadd.f32 %v1321, %v1259
        %v1323 = vadd.f32 %v1322, %v1260
        %v1324 = vadd.f32 %v1323, %v1261
        %v1325 = vadd.f32 %v1324, %v1262
        %v1326 = vadd.f32 %v1325, %v1263
        %v1327 = vadd.f32 %v1326, %v1264
        %v1328 = vadd.f32 %v1327, %v1265
        %v1329 = vadd.f32 %v1328, %v1266
        %v1330 = vadd.f32 %v1329, %v1267
        %v1331 = vadd.f32 %v1330, %v1268
        %v1332 = vadd.f32 %v1331, %v1269
        %v1333 = vadd.f32 %v1332, %v1270
        %v1334 = vadd.f32 %v1333, %v1271
        %v1335 = vadd.f32 %v1334, %v1272
        %v1336 = vadd.f32 %v1335, %v1273
        %v1337 = vadd.f32 %v1336, %v1274
        %v1338 = vadd.f32 %v1337, %v1275
        %v1339 = vadd.f32 %v1338, %v1276
        %v1340 = vadd.f32 %v1339, %v1277
        %v1341 = vadd.f32 %v1340, %v1278
        %v1342 = vadd.f32 %v1341, %v1279
        %v1343 = vrot.slane %v1342, 4
        %v1344 = vadd.f32 %v1342, %v1343
        %v1345 = vrot.slane %v1344, 2
        %v1346 = vadd.f32 %v1344, %v1345
        %v1347 = vrot.slane %v1346, 1
        %v1348 = vadd.f32 %v1346, %v1347
        %1349 = vst [vmem:[%s267] sm:$0x1] %v1348
        %v1350 = vmul.f32 %v1216, %v639
        %v1351 = vmul.f32 %v1217, %v642
        %v1352 = vmul.f32 %v1218, %v647
        %v1353 = vmul.f32 %v1219, %v650
        %v1354 = vmul.f32 %v1220, %v655
        %v1355 = vmul.f32 %v1221, %v658
        %v1356 = vmul.f32 %v1222, %v663
        %v1357 = vmul.f32 %v1223, %v666
        %v1358 = vmul.f32 %v1224, %v671
        %v1359 = vmul.f32 %v1225, %v674
        %v1360 = vmul.f32 %v1226, %v679
        %v1361 = vmul.f32 %v1227, %v682
        %v1362 = vmul.f32 %v1228, %v687
        %v1363 = vmul.f32 %v1229, %v690
        %v1364 = vmul.f32 %v1230, %v695
        %v1365 = vmul.f32 %v1231, %v698
        %v1366 = vmul.f32 %v1232, %v703
        %v1367 = vmul.f32 %v1233, %v706
        %v1368 = vmul.f32 %v1234, %v711
        %v1369 = vmul.f32 %v1235, %v714
        %v1370 = vmul.f32 %v1236, %v719
        %v1371 = vmul.f32 %v1237, %v722
        %v1372 = vmul.f32 %v1238, %v727
        %v1373 = vmul.f32 %v1239, %v730
        %v1374 = vmul.f32 %v1240, %v735
        %v1375 = vmul.f32 %v1241, %v738
        %v1376 = vmul.f32 %v1242, %v743
        %v1377 = vmul.f32 %v1243, %v746
        %v1378 = vmul.f32 %v1244, %v751
        %v1379 = vmul.f32 %v1245, %v754
        %v1380 = vmul.f32 %v1246, %v759
        %v1381 = vmul.f32 %v1247, %v762
        %v1382 = vmul.f32 %v1248, %v767
        %v1383 = vmul.f32 %v1249, %v770
        %v1384 = vmul.f32 %v1250, %v775
        %v1385 = vmul.f32 %v1251, %v778
        %v1386 = vmul.f32 %v1252, %v783
        %v1387 = vmul.f32 %v1253, %v786
        %v1388 = vmul.f32 %v1254, %v791
        %v1389 = vmul.f32 %v1255, %v794
        %v1390 = vmul.f32 %v1256, %v799
        %v1391 = vmul.f32 %v1257, %v802
        %v1392 = vmul.f32 %v1258, %v807
        %v1393 = vmul.f32 %v1259, %v810
        %v1394 = vmul.f32 %v1260, %v815
        %v1395 = vmul.f32 %v1261, %v818
        %v1396 = vmul.f32 %v1262, %v823
        %v1397 = vmul.f32 %v1263, %v826
        %v1398 = vmul.f32 %v1264, %v831
        %v1399 = vmul.f32 %v1265, %v834
        %v1400 = vmul.f32 %v1266, %v839
        %v1401 = vmul.f32 %v1267, %v842
        %v1402 = vmul.f32 %v1268, %v847
        %v1403 = vmul.f32 %v1269, %v850
        %v1404 = vmul.f32 %v1270, %v855
        %v1405 = vmul.f32 %v1271, %v858
        %v1406 = vmul.f32 %v1272, %v863
        %v1407 = vmul.f32 %v1273, %v866
        %v1408 = vmul.f32 %v1274, %v871
        %v1409 = vmul.f32 %v1275, %v874
        %v1410 = vmul.f32 %v1276, %v879
        %v1411 = vmul.f32 %v1277, %v882
        %v1412 = vmul.f32 %v1278, %v887
        %v1413 = vmul.f32 %v1279, %v890
        %v1414 = vadd.f32 %v1350, %v1351
        %v1415 = vadd.f32 %v1414, %v1352
        %v1416 = vadd.f32 %v1415, %v1353
        %v1417 = vadd.f32 %v1416, %v1354
        %v1418 = vadd.f32 %v1417, %v1355
        %v1419 = vadd.f32 %v1418, %v1356
        %v1420 = vadd.f32 %v1419, %v1357
        %v1421 = vadd.f32 %v1420, %v1358
        %v1422 = vadd.f32 %v1421, %v1359
        %v1423 = vadd.f32 %v1422, %v1360
        %v1424 = vadd.f32 %v1423, %v1361
        %v1425 = vadd.f32 %v1424, %v1362
        %v1426 = vadd.f32 %v1425, %v1363
        %v1427 = vadd.f32 %v1426, %v1364
        %v1428 = vadd.f32 %v1427, %v1365
        %v1429 = vadd.f32 %v1428, %v1366
        %v1430 = vadd.f32 %v1429, %v1367
        %v1431 = vadd.f32 %v1430, %v1368
        %v1432 = vadd.f32 %v1431, %v1369
        %v1433 = vadd.f32 %v1432, %v1370
        %v1434 = vadd.f32 %v1433, %v1371
        %v1435 = vadd.f32 %v1434, %v1372
        %v1436 = vadd.f32 %v1435, %v1373
        %v1437 = vadd.f32 %v1436, %v1374
        %v1438 = vadd.f32 %v1437, %v1375
        %v1439 = vadd.f32 %v1438, %v1376
        %v1440 = vadd.f32 %v1439, %v1377
        %v1441 = vadd.f32 %v1440, %v1378
        %v1442 = vadd.f32 %v1441, %v1379
        %v1443 = vadd.f32 %v1442, %v1380
        %v1444 = vadd.f32 %v1443, %v1381
        %v1445 = vadd.f32 %v1444, %v1382
        %v1446 = vadd.f32 %v1445, %v1383
        %v1447 = vadd.f32 %v1446, %v1384
        %v1448 = vadd.f32 %v1447, %v1385
        %v1449 = vadd.f32 %v1448, %v1386
        %v1450 = vadd.f32 %v1449, %v1387
        %v1451 = vadd.f32 %v1450, %v1388
        %v1452 = vadd.f32 %v1451, %v1389
        %v1453 = vadd.f32 %v1452, %v1390
        %v1454 = vadd.f32 %v1453, %v1391
        %v1455 = vadd.f32 %v1454, %v1392
        %v1456 = vadd.f32 %v1455, %v1393
        %v1457 = vadd.f32 %v1456, %v1394
        %v1458 = vadd.f32 %v1457, %v1395
        %v1459 = vadd.f32 %v1458, %v1396
        %v1460 = vadd.f32 %v1459, %v1397
        %v1461 = vadd.f32 %v1460, %v1398
        %v1462 = vadd.f32 %v1461, %v1399
        %v1463 = vadd.f32 %v1462, %v1400
        %v1464 = vadd.f32 %v1463, %v1401
        %v1465 = vadd.f32 %v1464, %v1402
        %v1466 = vadd.f32 %v1465, %v1403
        %v1467 = vadd.f32 %v1466, %v1404
        %v1468 = vadd.f32 %v1467, %v1405
        %v1469 = vadd.f32 %v1468, %v1406
        %v1470 = vadd.f32 %v1469, %v1407
        %v1471 = vadd.f32 %v1470, %v1408
        %v1472 = vadd.f32 %v1471, %v1409
        %v1473 = vadd.f32 %v1472, %v1410
        %v1474 = vadd.f32 %v1473, %v1411
        %v1475 = vadd.f32 %v1474, %v1412
        %v1476 = vadd.f32 %v1475, %v1413
        %v1477 = vrot.slane %v1476, 4
        %v1478 = vadd.f32 %v1476, %v1477
        %v1479 = vrot.slane %v1478, 2
        %v1480 = vadd.f32 %v1478, %v1479
        %v1481 = vrot.slane %v1480, 1
        %v1482 = vadd.f32 %v1480, %v1481
        %1483 = vst [vmem:[%s273] sm:$0x1] %v1482
        %1484 = vst [vmem:[%s261] sm:$0xff] %v639
        %1485 = vst [vmem:[%s261 + $0x8] sm:$0xff] %v642
        %1486 = vst [vmem:[%s261 + $0x10] sm:$0xff] %v647
        %1487 = vst [vmem:[%s261 + $0x18] sm:$0xff] %v650
        %1488 = vst [vmem:[%s261 + $0x20] sm:$0xff] %v655
        %1489 = vst [vmem:[%s261 + $0x28] sm:$0xff] %v658
        %1490 = vst [vmem:[%s261 + $0x30] sm:$0xff] %v663
        %1491 = vst [vmem:[%s261 + $0x38] sm:$0xff] %v666
        %1492 = vst [vmem:[%s261 + $0x40] sm:$0xff] %v671
        %1493 = vst [vmem:[%s261 + $0x48] sm:$0xff] %v674
        %1494 = vst [vmem:[%s261 + $0x50] sm:$0xff] %v679
        %1495 = vst [vmem:[%s261 + $0x58] sm:$0xff] %v682
        %1496 = vst [vmem:[%s261 + $0x60] sm:$0xff] %v687
        %1497 = vst [vmem:[%s261 + $0x68] sm:$0xff] %v690
        %1498 = vst [vmem:[%s261 + $0x70] sm:$0xff] %v695
        %1499 = vst [vmem:[%s261 + $0x78] sm:$0xff] %v698
        %1500 = vst [vmem:[%s261 + $0x80] sm:$0xff] %v703
        %1501 = vst [vmem:[%s261 + $0x88] sm:$0xff] %v706
        %1502 = vst [vmem:[%s261 + $0x90] sm:$0xff] %v711
        %1503 = vst [vmem:[%s261 + $0x98] sm:$0xff] %v714
        %1504 = vst [vmem:[%s261 + $0xa0] sm:$0xff] %v719
        %1505 = vst [vmem:[%s261 + $0xa8] sm:$0xff] %v722
        %1506 = vst [vmem:[%s261 + $0xb0] sm:$0xff] %v727
        %1507 = vst [vmem:[%s261 + $0xb8] sm:$0xff] %v730
        %1508 = vst [vmem:[%s261 + $0xc0] sm:$0xff] %v735
        %1509 = vst [vmem:[%s261 + $0xc8] sm:$0xff] %v738
        %1510 = vst [vmem:[%s261 + $0xd0] sm:$0xff] %v743
        %1511 = vst [vmem:[%s261 + $0xd8] sm:$0xff] %v746
        %1512 = vst [vmem:[%s261 + $0xe0] sm:$0xff] %v751
        %1513 = vst [vmem:[%s261 + $0xe8] sm:$0xff] %v754
        %1514 = vst [vmem:[%s261 + $0xf0] sm:$0xff] %v759
        %1515 = vst [vmem:[%s261 + $0xf8] sm:$0xff] %v762
        %1516 = vst [vmem:[%s261 + $0x100] sm:$0xff] %v767
        %1517 = vst [vmem:[%s261 + $0x108] sm:$0xff] %v770
        %1518 = vst [vmem:[%s261 + $0x110] sm:$0xff] %v775
        %1519 = vst [vmem:[%s261 + $0x118] sm:$0xff] %v778
        %1520 = vst [vmem:[%s261 + $0x120] sm:$0xff] %v783
        %1521 = vst [vmem:[%s261 + $0x128] sm:$0xff] %v786
        %1522 = vst [vmem:[%s261 + $0x130] sm:$0xff] %v791
        %1523 = vst [vmem:[%s261 + $0x138] sm:$0xff] %v794
        %1524 = vst [vmem:[%s261 + $0x140] sm:$0xff] %v799
        %1525 = vst [vmem:[%s261 + $0x148] sm:$0xff] %v802
        %1526 = vst [vmem:[%s261 + $0x150] sm:$0xff] %v807
        %1527 = vst [vmem:[%s261 + $0x158] sm:$0xff] %v810
        %1528 = vst [vmem:[%s261 + $0x160] sm:$0xff] %v815
        %1529 = vst [vmem:[%s261 + $0x168] sm:$0xff] %v818
        %1530 = vst [vmem:[%s261 + $0x170] sm:$0xff] %v823
        %1531 = vst [vmem:[%s261 + $0x178] sm:$0xff] %v826
        %1532 = vst [vmem:[%s261 + $0x180] sm:$0xff] %v831
        %1533 = vst [vmem:[%s261 + $0x188] sm:$0xff] %v834
        %1534 = vst [vmem:[%s261 + $0x190] sm:$0xff] %v839
        %1535 = vst [vmem:[%s261 + $0x198] sm:$0xff] %v842
        %1536 = vst [vmem:[%s261 + $0x1a0] sm:$0xff] %v847
        %1537 = vst [vmem:[%s261 + $0x1a8] sm:$0xff] %v850
        %1538 = vst [vmem:[%s261 + $0x1b0] sm:$0xff] %v855
        %1539 = vst [vmem:[%s261 + $0x1b8] sm:$0xff] %v858
        %1540 = vst [vmem:[%s261 + $0x1c0] sm:$0xff] %v863
        %1541 = vst [vmem:[%s261 + $0x1c8] sm:$0xff] %v866
        %1542 = vst [vmem:[%s261 + $0x1d0] sm:$0xff] %v871
        %1543 = vst [vmem:[%s261 + $0x1d8] sm:$0xff] %v874
        %1544 = vst [vmem:[%s261 + $0x1e0] sm:$0xff] %v879
        %1545 = vst [vmem:[%s261 + $0x1e8] sm:$0xff] %v882
        %1546 = vst [vmem:[%s261 + $0x1f0] sm:$0xff] %v887
        %1547 = vst [vmem:[%s261 + $0x1f8] sm:$0xff] %v890
        %s1548 = sand.u32 %s103, 1
        %s1549 = scalar_lea.sflag [#allocation4], %s1548
        %s1550 = sand.u32 %s103, 1
        %s1551 = smul.addr %s1550, 512
        %s1552 = scalar_lea.vmem [#allocation7], %s1551
        %s1553 = sand.u32 %s27, 1
        %s1554 = scalar_lea.sflag [#allocation9], %s1553
        %s1555 = sand.u32 %s129, 1
        %s1556 = scalar_lea.vmem [#allocation8], %s1555
        %s1557 = sand.u32 %s27, 1
        %s1558 = scalar_lea.sflag [#allocation9], %s1557
        %s1559 = sand.u32 %s155, 1
        %s1560 = scalar_lea.vmem [#allocation10], %s1559
        // Predicated region
        $region41: #{tpu_custom_call.1} parent=31 // pred_check
          %p1561 = pneg %p113
        $region42: #{tpu_custom_call.1} parent=31 // pred_check_branch
          %1563 = sbr.rel (%p1561) target = $region44
        $region43: #{tpu_custom_call.1} parent=31 // pred_region
          %s1564 = smul.u32 64, %s27
          %s1566 = ssub.s32 8192, 8192
          %1567 = vsyncadd %s1549, %s1566
          %s1568 = smul.addr %s1564, 128
          %s1569 = scalar_lea.hbm %s3, %s1568
          %s1570 = sshll.u32 %s1552, 4
          %s1571 = int_to_ptr.vmem [resolvable:$true] %s1570
          %1576 = dma.vmem_to_hbm [thread:$0]  %s1571, 8192, %s1569, %s1549, 128, 128, 8
        $region44: #{tpu_custom_call.1} parent=31 // pred_fallthru
          _
        // Predicated region
        $region45: #{tpu_custom_call.1} parent=31 // pred_check
          %p1577 = pneg %p139
        $region46: #{tpu_custom_call.1} parent=31 // pred_check_branch
          %1579 = sbr.rel (%p1577) target = $region48
        $region47: #{tpu_custom_call.1} parent=31 // pred_region
          %s1581 = ssub.s32 16, 16
          %1582 = vsyncadd %s1554, %s1581
          %s1583 = smul.addr %s27, 16
          %s1584 = scalar_lea.hbm %s4, %s1583
          %s1586 = sshll.u32 %s1556, 4
          %s1587 = int_to_ptr.vmem [resolvable:$true] %s1586
          %1589 = dma.vmem_to_hbm [thread:$0]  %s1587, 16, %s1584, %s1554
        $region48: #{tpu_custom_call.1} parent=31 // pred_fallthru
          _
        // Predicated region
        $region49: #{tpu_custom_call.1} parent=31 // pred_check
          %p1590 = pneg %p165
        $region50: #{tpu_custom_call.1} parent=31 // pred_check_branch
          %1592 = sbr.rel (%p1590) target = $region52
        $region51: #{tpu_custom_call.1} parent=31 // pred_region
          %s1594 = ssub.s32 16, 16
          %1595 = vsyncadd %s1558, %s1594
          %s1596 = smul.addr %s27, 16
          %s1597 = scalar_lea.hbm %s5, %s1596
          %s1599 = sshll.u32 %s1560, 4
          %s1600 = int_to_ptr.vmem [resolvable:$true] %s1599
          %1602 = dma.vmem_to_hbm [thread:$0]  %s1600, 16, %s1597, %s1558
        $region52: #{tpu_custom_call.1} parent=31 // pred_fallthru
          _
      $region32: #{tpu_custom_call.1} parent=5 // pred_fallthru
        _
      %p1603 = scmp.le.s32.totalorder 2, %s22
      // Predicated region
      $region53: #{tpu_custom_call.1} parent=5 // pred_check
        %p1604 = pneg %p1603
      $region54: #{tpu_custom_call.1} parent=5 // pred_check_branch
        %1606 = sbr.rel (%p1604) target = $region56
      $region55: #{tpu_custom_call.1} parent=5 // pred_region
        %s1607 = ssub.s32 %s22, 2
        // Predicated region
        $region57: #{tpu_custom_call.1} parent=55 // pred_check
          %p1608 = pneg %p119
        $region58: #{tpu_custom_call.1} parent=55 // pred_check_branch
          %1610 = sbr.rel (%p1608) target = $region60
        $region59: #{tpu_custom_call.1} parent=55 // pred_region
          %s1611 = sand.u32 %s104, 1
          %s1612 = scalar_lea.sflag [#allocation4], %s1611
          %s1613 = sand.u32 %s104, 1
          %s1614 = smul.addr %s1613, 512
          %s1615 = scalar_lea.vmem [#allocation7], %s1614
          %1616 = dma.done %s1612, 8192
        $region60: #{tpu_custom_call.1} parent=55 // pred_fallthru
          _
        // Predicated region
        $region61: #{tpu_custom_call.1} parent=55 // pred_check
          %p1617 = pneg %p145
        $region62: #{tpu_custom_call.1} parent=55 // pred_check_branch
          %1619 = sbr.rel (%p1617) target = $region64
        $region63: #{tpu_custom_call.1} parent=55 // pred_region
          %s1620 = sand.u32 %s28, 1
          %s1621 = scalar_lea.sflag [#allocation9], %s1620
          %s1622 = sand.u32 %s130, 1
          %s1623 = scalar_lea.vmem [#allocation8], %s1622
          %1624 = dma.done %s1621, 16
        $region64: #{tpu_custom_call.1} parent=55 // pred_fallthru
          _
        // Predicated region
        $region65: #{tpu_custom_call.1} parent=55 // pred_check
          %p1625 = pneg %p171
        $region66: #{tpu_custom_call.1} parent=55 // pred_check_branch
          %1627 = sbr.rel (%p1625) target = $region68
        $region67: #{tpu_custom_call.1} parent=55 // pred_region
          %s1628 = sand.u32 %s28, 1
          %s1629 = scalar_lea.sflag [#allocation9], %s1628
          %s1630 = sand.u32 %s156, 1
          %s1631 = scalar_lea.vmem [#allocation10], %s1630
          %1632 = dma.done %s1629, 16
        $region68: #{tpu_custom_call.1} parent=55 // pred_fallthru
          _
      $region56: #{tpu_custom_call.1} parent=5 // pred_fallthru
        _
    $region6: #{tpu_custom_call.1} parent=1 // loop_footer
      %s26 = sadd.s32 1, %s22
    $region7: #{tpu_custom_call.1} parent=1 // loop_footer_branch
      %21 = sbr.rel target = $region3
    $region8: #{tpu_custom_call.1} parent=1 // loop_exit
      _
    %1633 = vsyncpa [#allocation3], 1
    %s1634 = scalar_lea.sflag [#allocation3], 1
    %1635 = vsyncpa %s1634, 1
    %1636 = vsyncpa [#allocation6], 1
    %1637 = vsyncpa [#allocation4], 1
    %s1638 = scalar_lea.sflag [#allocation4], 1
    %1639 = vsyncpa %s1638, 1
    %1640 = vsyncpa [#allocation9], 1
    %s1641 = scalar_lea.sflag [#allocation9], 1
    %1642 = vsyncpa %s1641, 1

</llo_original>
